<compile_context>
chip_gen: v7x
topology: tpu7x:2x2x1
jax: 0.10.0
libtpu: 0.0.40
codegen_flags: <defaults>
</compile_context>

<pallas_src>
import jax
import jax.numpy as jnp
from jax.experimental import pallas as pl
from jax.experimental.pallas import tpu as pltpu

LATENT = 64
VENC = 128     # visual_encode_len
HIDDEN = 128

_VMEM = pl.BlockSpec(memory_space=pltpu.MemorySpace.VMEM)


# ---------------------------------------------------------------------------
# Fused Pallas kernel: the whole forward pass in one body
# ---------------------------------------------------------------------------

def _cvae_fused_kernel(o0_ref, o1_ref, eps_ref,
                       w_enc_ref, b_enc_ref,
                       w_h0_ref, w_h1_ref, b_h_ref,
                       w_ml_ref, b_ml_ref,
                       w_cz_ref, w_co_ref, b_c_ref,
                       w_r1_ref, b_r1_ref,
                       w_r2_ref, b_r2_ref,
                       ml_ref, z_ref, kl_ref, rec_ref):
    f32 = jnp.float32

    def mm(a, w_ref, b_ref=None):
        y = jnp.dot(a, w_ref[...], preferred_element_type=f32)
        if b_ref is not None:
            y = y + b_ref[...]
        return y

    # --- metric.encode stand-in (same metric encoder for o0 and o1) ---
    o0_enc = mm(o0_ref[...], w_enc_ref, b_enc_ref)          # (B, VENC)
    o1_enc = mm(o1_ref[...], w_enc_ref, b_enc_ref)          # (B, VENC)

    # --- posterior_z: tau = cat(o0_enc, o1_enc); split-weight matmul ---
    h = mm(o0_enc, w_h0_ref) + mm(o1_enc, w_h1_ref) + b_h_ref[...]
    h = jnp.maximum(h, 0.0)                                 # (B, HIDDEN)
    ml = mm(h, w_ml_ref, b_ml_ref)                          # (B, 2*LATENT): [mu | logvar]
    mu = ml[:, :LATENT]
    lv = ml[:, LATENT:]

    # --- reparameterize ---
    z_hat = mu + eps_ref[...] * jnp.exp(0.5 * lv)           # (B, LATENT)

    # --- condition_encode(z_hat, o0_enc): cat -> Linear (split weights) ---
    z = mm(z_hat, w_cz_ref) + mm(o0_enc, w_co_ref) + b_c_ref[...]   # (B, LATENT)

    # --- recon_model: Linear -> ReLU -> Linear -> Sigmoid ---
    r1 = jnp.maximum(mm(z, w_r1_ref, b_r1_ref), 0.0)        # (B, LATENT)
    recon = jax.nn.sigmoid(mm(r1, w_r2_ref, b_r2_ref))      # (B, VENC)

    # --- losses (sum then scale; scalars reshaped to (1,1) outputs) ---
    kl = -0.5 * (1.0 + lv - mu * mu - jnp.exp(lv))
    kl_ref[...] = (jnp.sum(kl) * (1.0 / kl.size)).reshape(1, 1)

    diff = o1_enc - recon
    rec_ref[...] = (jnp.sum(diff * diff) * (1.0 / diff.size)).reshape(1, 1)

    ml_ref[...] = ml        # lane-dense (B, 128) combined mu|logvar output
    z_ref[...] = z


# ---------------------------------------------------------------------------
# Wrapper
# ---------------------------------------------------------------------------

def task_cvae2_forward(params, o0, o1, eps):
    """Mirror of TaskCVAEModel2.forward(o0, o1, metric, finetune=False).

    Returns (kl_loss_z, (z_mean, z_log_var), z, recon_loss)."""
    B = o0.shape[0]
    o0f = o0.reshape(B, -1).astype(jnp.float32)
    o1f = o1.reshape(B, -1).astype(jnp.float32)

    out_shapes = (
        jax.ShapeDtypeStruct((B, 2 * LATENT), jnp.float32),   # [mu | logvar]
        jax.ShapeDtypeStruct((B, LATENT), jnp.float32),       # z
        jax.ShapeDtypeStruct((1, 1), jnp.float32),            # kl
        jax.ShapeDtypeStruct((1, 1), jnp.float32),            # recon mse
    )

    ml, z, kl, rec = pl.pallas_call(
        _cvae_fused_kernel,
        out_shape=out_shapes,
        in_specs=[_VMEM] * 17,
        out_specs=(_VMEM, _VMEM, _VMEM, _VMEM),
    )(o0f, o1f, eps,
      params["w_enc"], params["b_enc"],
      params["w_h0"], params["w_h1"], params["b_h"],
      params["w_ml"], params["b_ml"],
      params["w_cz"], params["w_co"], params["b_c"],
      params["w_r1"], params["b_r1"],
      params["w_r2"], params["b_r2"])

    z_mean = ml[:, :LATENT]
    z_log_var = ml[:, LATENT:]
    return kl[0, 0], (z_mean, z_log_var), z, rec[0, 0]


def init_params(key, obs_flat_dim):
    keys = jax.random.split(key, 8)
    s = 0.05

    def dense(k, m, n):
        return s * jax.random.normal(k, (m, n), jnp.float32)

    def zeros(n):
        return jnp.zeros((1, n), jnp.float32)

    return {
        # metric.encode stand-in
        "w_enc": dense(keys[0], obs_flat_dim, VENC), "b_enc": zeros(VENC),
        # TaskLatentEncode: cat(o0_enc, o1_enc) -> hidden (split weights)
        "w_h0": dense(keys[1], VENC, HIDDEN),
        "w_h1": dense(keys[2], VENC, HIDDEN),
        "b_h": zeros(HIDDEN),
        # fc_mean | fc_logvar concatenated along N
        "w_ml": dense(keys[3], HIDDEN, 2 * LATENT), "b_ml": zeros(2 * LATENT),
        # ConditionEncode: cat(z_hat, o0_enc) -> latent (split weights)
        "w_cz": dense(keys[4], LATENT, LATENT),
        "w_co": dense(keys[5], VENC, LATENT),
        "b_c": zeros(LATENT),
        # recon_model
        "w_r1": dense(keys[6], LATENT, LATENT), "b_r1": zeros(LATENT),
        "w_r2": dense(keys[7], LATENT, VENC), "b_r2": zeros(VENC),
    }


if __name__ == "__main__":
    key = jax.random.PRNGKey(0)
    k_o0, k_o1, k_eps, k_params = jax.random.split(key, 4)

    B, C, H, W = 2, 4, 16, 16
    obs_flat_dim = C * H * W

    o0 = jax.random.normal(k_o0, (B, C, H, W), jnp.float32)
    o1 = jax.random.normal(k_o1, (B, C, H, W), jnp.float32)
    eps = jax.random.normal(k_eps, (B, LATENT), jnp.float32)

    params = init_params(k_params, obs_flat_dim)

    fwd = jax.jit(task_cvae2_forward)
    kl_loss, (z_mean, z_log_var), z, recon_loss = fwd(params, o0, o1, eps)

    jax.block_until_ready((kl_loss, z_mean, z_log_var, z, recon_loss))
    assert kl_loss.shape == ()
    assert recon_loss.shape == ()
    assert z_mean.shape == (B, LATENT)
    assert z_log_var.shape == (B, LATENT)
    assert z.shape == (B, LATENT)
    assert bool(jnp.isfinite(kl_loss)) and bool(jnp.isfinite(recon_loss))
    print("KERNEL_OK")
</pallas_src>

<mosaic_0001>
module attributes {stable_mosaic.version = 11 : i64} {
  func.func @_cvae_fused_kernel(%arg0: memref<2x1024xf32, #tpu.memory_space<vmem>>, %arg1: memref<2x1024xf32, #tpu.memory_space<vmem>>, %arg2: memref<2x64xf32, #tpu.memory_space<vmem>>, %arg3: memref<1024x128xf32, #tpu.memory_space<vmem>>, %arg4: memref<1x128xf32, #tpu.memory_space<vmem>>, %arg5: memref<128x128xf32, #tpu.memory_space<vmem>>, %arg6: memref<128x128xf32, #tpu.memory_space<vmem>>, %arg7: memref<1x128xf32, #tpu.memory_space<vmem>>, %arg8: memref<128x128xf32, #tpu.memory_space<vmem>>, %arg9: memref<1x128xf32, #tpu.memory_space<vmem>>, %arg10: memref<64x64xf32, #tpu.memory_space<vmem>>, %arg11: memref<128x64xf32, #tpu.memory_space<vmem>>, %arg12: memref<1x64xf32, #tpu.memory_space<vmem>>, %arg13: memref<64x64xf32, #tpu.memory_space<vmem>>, %arg14: memref<1x64xf32, #tpu.memory_space<vmem>>, %arg15: memref<64x128xf32, #tpu.memory_space<vmem>>, %arg16: memref<1x128xf32, #tpu.memory_space<vmem>>, %arg17: memref<2x128xf32, #tpu.memory_space<vmem>>, %arg18: memref<2x64xf32, #tpu.memory_space<vmem>>, %arg19: memref<1x1xf32, #tpu.memory_space<vmem>>, %arg20: memref<1x1xf32, #tpu.memory_space<vmem>>) attributes {dimension_semantics = [], scalar_prefetch = 0 : i64, scratch_operands = 0 : i64, tpu.core_type = #tpu.core_type<tc>} {
    %c0 = arith.constant 0 : index
    %c0_0 = arith.constant 0 : index
    %0 = vector.load %arg0[%c0, %c0_0] : memref<2x1024xf32, #tpu.memory_space<vmem>>, vector<2x1024xf32>
    %c0_1 = arith.constant 0 : index
    %c0_2 = arith.constant 0 : index
    %1 = vector.load %arg3[%c0_1, %c0_2] : memref<1024x128xf32, #tpu.memory_space<vmem>>, vector<1024x128xf32>
    %cst = arith.constant dense<0.000000e+00> : vector<2x128xf32>
    %2 = tpu.matmul %0, %1, %cst {dimension_numbers = #tpu.dot_dimension_numbers<[1], [0], [0], [1], [0, 0, 1, 1], [], []>} : vector<2x1024xf32>, vector<1024x128xf32>, vector<2x128xf32> -> vector<2x128xf32>
    %c0_3 = arith.constant 0 : index
    %c0_4 = arith.constant 0 : index
    %3 = vector.load %arg4[%c0_3, %c0_4] : memref<1x128xf32, #tpu.memory_space<vmem>>, vector<1x128xf32>
    %4 = vector.broadcast %3 : vector<1x128xf32> to vector<2x128xf32>
    %5 = arith.addf %2, %4 : vector<2x128xf32>
    %c0_5 = arith.constant 0 : index
    %c0_6 = arith.constant 0 : index
    %6 = vector.load %arg1[%c0_5, %c0_6] : memref<2x1024xf32, #tpu.memory_space<vmem>>, vector<2x1024xf32>
    %c0_7 = arith.constant 0 : index
    %c0_8 = arith.constant 0 : index
    %7 = vector.load %arg3[%c0_7, %c0_8] : memref<1024x128xf32, #tpu.memory_space<vmem>>, vector<1024x128xf32>
    %cst_9 = arith.constant dense<0.000000e+00> : vector<2x128xf32>
    %8 = tpu.matmul %6, %7, %cst_9 {dimension_numbers = #tpu.dot_dimension_numbers<[1], [0], [0], [1], [0, 0, 1, 1], [], []>} : vector<2x1024xf32>, vector<1024x128xf32>, vector<2x128xf32> -> vector<2x128xf32>
    %c0_10 = arith.constant 0 : index
    %c0_11 = arith.constant 0 : index
    %9 = vector.load %arg4[%c0_10, %c0_11] : memref<1x128xf32, #tpu.memory_space<vmem>>, vector<1x128xf32>
    %10 = vector.broadcast %9 : vector<1x128xf32> to vector<2x128xf32>
    %11 = arith.addf %8, %10 : vector<2x128xf32>
    %c0_12 = arith.constant 0 : index
    %c0_13 = arith.constant 0 : index
    %12 = vector.load %arg5[%c0_12, %c0_13] : memref<128x128xf32, #tpu.memory_space<vmem>>, vector<128x128xf32>
    %cst_14 = arith.constant dense<0.000000e+00> : vector<2x128xf32>
    %13 = tpu.matmul %5, %12, %cst_14 {dimension_numbers = #tpu.dot_dimension_numbers<[1], [0], [0], [1], [0, 0, 1, 1], [], []>} : vector<2x128xf32>, vector<128x128xf32>, vector<2x128xf32> -> vector<2x128xf32>
    %c0_15 = arith.constant 0 : index
    %c0_16 = arith.constant 0 : index
    %14 = vector.load %arg6[%c0_15, %c0_16] : memref<128x128xf32, #tpu.memory_space<vmem>>, vector<128x128xf32>
    %cst_17 = arith.constant dense<0.000000e+00> : vector<2x128xf32>
    %15 = tpu.matmul %11, %14, %cst_17 {dimension_numbers = #tpu.dot_dimension_numbers<[1], [0], [0], [1], [0, 0, 1, 1], [], []>} : vector<2x128xf32>, vector<128x128xf32>, vector<2x128xf32> -> vector<2x128xf32>
    %16 = arith.addf %13, %15 : vector<2x128xf32>
    %c0_18 = arith.constant 0 : index
    %c0_19 = arith.constant 0 : index
    %17 = vector.load %arg7[%c0_18, %c0_19] : memref<1x128xf32, #tpu.memory_space<vmem>>, vector<1x128xf32>
    %18 = vector.broadcast %17 : vector<1x128xf32> to vector<2x128xf32>
    %19 = arith.addf %16, %18 : vector<2x128xf32>
    %cst_20 = arith.constant 0.000000e+00 : f32
    %20 = vector.broadcast %cst_20 : f32 to vector<2x128xf32>
    %21 = arith.maximumf %19, %20 : vector<2x128xf32>
    %c0_21 = arith.constant 0 : index
    %c0_22 = arith.constant 0 : index
    %22 = vector.load %arg8[%c0_21, %c0_22] : memref<128x128xf32, #tpu.memory_space<vmem>>, vector<128x128xf32>
    %cst_23 = arith.constant dense<0.000000e+00> : vector<2x128xf32>
    %23 = tpu.matmul %21, %22, %cst_23 {dimension_numbers = #tpu.dot_dimension_numbers<[1], [0], [0], [1], [0, 0, 1, 1], [], []>} : vector<2x128xf32>, vector<128x128xf32>, vector<2x128xf32> -> vector<2x128xf32>
    %c0_24 = arith.constant 0 : index
    %c0_25 = arith.constant 0 : index
    %24 = vector.load %arg9[%c0_24, %c0_25] : memref<1x128xf32, #tpu.memory_space<vmem>>, vector<1x128xf32>
    %25 = vector.broadcast %24 : vector<1x128xf32> to vector<2x128xf32>
    %26 = arith.addf %23, %25 : vector<2x128xf32>
    %27 = vector.extract_strided_slice %26 {offsets = [0, 0], sizes = [2, 64], strides = [1, 1]} : vector<2x128xf32> to vector<2x64xf32>
    %28 = vector.extract_strided_slice %26 {offsets = [0, 64], sizes = [2, 64], strides = [1, 1]} : vector<2x128xf32> to vector<2x64xf32>
    %c0_26 = arith.constant 0 : index
    %c0_27 = arith.constant 0 : index
    %29 = vector.load %arg2[%c0_26, %c0_27] : memref<2x64xf32, #tpu.memory_space<vmem>>, vector<2x64xf32>
    %cst_28 = arith.constant 5.000000e-01 : f32
    %30 = vector.broadcast %cst_28 : f32 to vector<2x64xf32>
    %31 = arith.mulf %30, %28 : vector<2x64xf32>
    %32 = math.exp %31 : vector<2x64xf32>
    %33 = arith.mulf %29, %32 : vector<2x64xf32>
    %34 = arith.addf %27, %33 : vector<2x64xf32>
    %c0_29 = arith.constant 0 : index
    %c0_30 = arith.constant 0 : index
    %35 = vector.load %arg10[%c0_29, %c0_30] : memref<64x64xf32, #tpu.memory_space<vmem>>, vector<64x64xf32>
    %cst_31 = arith.constant dense<0.000000e+00> : vector<2x64xf32>
    %36 = tpu.matmul %34, %35, %cst_31 {dimension_numbers = #tpu.dot_dimension_numbers<[1], [0], [0], [1], [0, 0, 1, 1], [], []>} : vector<2x64xf32>, vector<64x64xf32>, vector<2x64xf32> -> vector<2x64xf32>
    %c0_32 = arith.constant 0 : index
    %c0_33 = arith.constant 0 : index
    %37 = vector.load %arg11[%c0_32, %c0_33] : memref<128x64xf32, #tpu.memory_space<vmem>>, vector<128x64xf32>
    %cst_34 = arith.constant dense<0.000000e+00> : vector<2x64xf32>
    %38 = tpu.matmul %5, %37, %cst_34 {dimension_numbers = #tpu.dot_dimension_numbers<[1], [0], [0], [1], [0, 0, 1, 1], [], []>} : vector<2x128xf32>, vector<128x64xf32>, vector<2x64xf32> -> vector<2x64xf32>
    %39 = arith.addf %36, %38 : vector<2x64xf32>
    %c0_35 = arith.constant 0 : index
    %c0_36 = arith.constant 0 : index
    %40 = vector.load %arg12[%c0_35, %c0_36] : memref<1x64xf32, #tpu.memory_space<vmem>>, vector<1x64xf32>
    %41 = vector.broadcast %40 : vector<1x64xf32> to vector<2x64xf32>
    %42 = arith.addf %39, %41 : vector<2x64xf32>
    %c0_37 = arith.constant 0 : index
    %c0_38 = arith.constant 0 : index
    %43 = vector.load %arg13[%c0_37, %c0_38] : memref<64x64xf32, #tpu.memory_space<vmem>>, vector<64x64xf32>
    %cst_39 = arith.constant dense<0.000000e+00> : vector<2x64xf32>
    %44 = tpu.matmul %42, %43, %cst_39 {dimension_numbers = #tpu.dot_dimension_numbers<[1], [0], [0], [1], [0, 0, 1, 1], [], []>} : vector<2x64xf32>, vector<64x64xf32>, vector<2x64xf32> -> vector<2x64xf32>
    %c0_40 = arith.constant 0 : index
    %c0_41 = arith.constant 0 : index
    %45 = vector.load %arg14[%c0_40, %c0_41] : memref<1x64xf32, #tpu.memory_space<vmem>>, vector<1x64xf32>
    %46 = vector.broadcast %45 : vector<1x64xf32> to vector<2x64xf32>
    %47 = arith.addf %44, %46 : vector<2x64xf32>
    %cst_42 = arith.constant 0.000000e+00 : f32
    %48 = vector.broadcast %cst_42 : f32 to vector<2x64xf32>
    %49 = arith.maximumf %47, %48 : vector<2x64xf32>
    %c0_43 = arith.constant 0 : index
    %c0_44 = arith.constant 0 : index
    %50 = vector.load %arg15[%c0_43, %c0_44] : memref<64x128xf32, #tpu.memory_space<vmem>>, vector<64x128xf32>
    %cst_45 = arith.constant dense<0.000000e+00> : vector<2x128xf32>
    %51 = tpu.matmul %49, %50, %cst_45 {dimension_numbers = #tpu.dot_dimension_numbers<[1], [0], [0], [1], [0, 0, 1, 1], [], []>} : vector<2x64xf32>, vector<64x128xf32>, vector<2x128xf32> -> vector<2x128xf32>
    %c0_46 = arith.constant 0 : index
    %c0_47 = arith.constant 0 : index
    %52 = vector.load %arg16[%c0_46, %c0_47] : memref<1x128xf32, #tpu.memory_space<vmem>>, vector<1x128xf32>
    %53 = vector.broadcast %52 : vector<1x128xf32> to vector<2x128xf32>
    %54 = arith.addf %51, %53 : vector<2x128xf32>
    %55 = arith.negf %54 : vector<2x128xf32>
    %56 = math.exp %55 : vector<2x128xf32>
    %cst_48 = arith.constant 1.000000e+00 : f32
    %57 = vector.broadcast %cst_48 : f32 to vector<2x128xf32>
    %58 = arith.addf %57, %56 : vector<2x128xf32>
    %59 = arith.divf %57, %58 : vector<2x128xf32>
    %cst_49 = arith.constant 1.000000e+00 : f32
    %60 = vector.broadcast %cst_49 : f32 to vector<2x64xf32>
    %61 = arith.addf %60, %28 : vector<2x64xf32>
    %62 = arith.mulf %27, %27 : vector<2x64xf32>
    %63 = arith.subf %61, %62 : vector<2x64xf32>
    %64 = math.exp %28 : vector<2x64xf32>
    %65 = arith.subf %63, %64 : vector<2x64xf32>
    %cst_50 = arith.constant -5.000000e-01 : f32
    %66 = vector.broadcast %cst_50 : f32 to vector<2x64xf32>
    %67 = arith.mulf %66, %65 : vector<2x64xf32>
    %68 = vector.shape_cast %67 : vector<2x64xf32> to vector<1x2x64xf32>
    %cst_51 = arith.constant dense<0.000000e+00> : vector<1xf32>
    %69 = vector.multi_reduction <add>, %68, %cst_51 [1, 2] : vector<1x2x64xf32> to vector<1xf32>
    %70 = vector.shape_cast %69 : vector<1xf32> to vector<1x1x1xf32>
    %71 = vector.extract %70[0, 0, 0] : f32 from vector<1x1x1xf32>
    %cst_52 = arith.constant 7.812500e-03 : f32
    %72 = arith.mulf %71, %cst_52 : f32
    %73 = vector.broadcast %72 : f32 to vector<1x1xf32>
    %c0_53 = arith.constant 0 : index
    %c0_54 = arith.constant 0 : index
    %74 = vector.load %arg19[%c0_53, %c0_54] : memref<1x1xf32, #tpu.memory_space<vmem>>, vector<1x1xf32>
    tpu.vector_store %arg19[%c0_53, %c0_54], %73 {strides = array<i32>} : memref<1x1xf32, #tpu.memory_space<vmem>>, vector<1x1xf32>,
    %75 = arith.subf %11, %59 : vector<2x128xf32>
    %76 = arith.mulf %75, %75 : vector<2x128xf32>
    %77 = vector.shape_cast %76 : vector<2x128xf32> to vector<1x2x128xf32>
    %cst_55 = arith.constant dense<0.000000e+00> : vector<1xf32>
    %78 = vector.multi_reduction <add>, %77, %cst_55 [1, 2] : vector<1x2x128xf32> to vector<1xf32>
    %79 = vector.shape_cast %78 : vector<1xf32> to vector<1x1x1xf32>
    %80 = vector.extract %79[0, 0, 0] : f32 from vector<1x1x1xf32>
    %cst_56 = arith.constant 3.906250e-03 : f32
    %81 = arith.mulf %80, %cst_56 : f32
    %82 = vector.broadcast %81 : f32 to vector<1x1xf32>
    %c0_57 = arith.constant 0 : index
    %c0_58 = arith.constant 0 : index
    %83 = vector.load %arg20[%c0_57, %c0_58] : memref<1x1xf32, #tpu.memory_space<vmem>>, vector<1x1xf32>
    tpu.vector_store %arg20[%c0_57, %c0_58], %82 {strides = array<i32>} : memref<1x1xf32, #tpu.memory_space<vmem>>, vector<1x1xf32>,
    %c0_59 = arith.constant 0 : index
    %c0_60 = arith.constant 0 : index
    %84 = vector.load %arg17[%c0_59, %c0_60] : memref<2x128xf32, #tpu.memory_space<vmem>>, vector<2x128xf32>
    tpu.vector_store %arg17[%c0_59, %c0_60], %26 {strides = array<i32>} : memref<2x128xf32, #tpu.memory_space<vmem>>, vector<2x128xf32>,
    %c0_61 = arith.constant 0 : index
    %c0_62 = arith.constant 0 : index
    %85 = vector.load %arg18[%c0_61, %c0_62] : memref<2x64xf32, #tpu.memory_space<vmem>>, vector<2x64xf32>
    tpu.vector_store %arg18[%c0_61, %c0_62], %42 {strides = array<i32>} : memref<2x64xf32, #tpu.memory_space<vmem>>, vector<2x64xf32>,
    return
  }
}

</mosaic_0001>

<llo_original>
// kernel: task_cvae2_forward.1
$region0: #{task_cvae2_forward.1}
  #allocation0 [shape = 'u32[]', space=smem, size = 0x4, offset = 0x4, fixed_abs, tag = 'smem constant byte address 0x4 - core index']
  #allocation1 [shape = 'u32[144,128]{1,0:T(1,128)}', space=vmem, size = 0x12000, scoped, tag = 'internal scratch']
  %s0 = inlined_call_operand.vmem [shape: f32[2,1024], index: 0, kind: input, shape index: {}]
  %s1 = inlined_call_operand.vmem [shape: f32[2,1024], index: 1, kind: input, shape index: {}]
  %s2 = inlined_call_operand.vmem [shape: f32[2,64], index: 2, kind: input, shape index: {}]
  %s3 = inlined_call_operand.hbm [shape: f32[1024,128], index: 3, kind: input, shape index: {}]
  %s4 = inlined_call_operand.vmem [shape: f32[1,128], index: 4, kind: input, shape index: {}]
  %s5 = inlined_call_operand.vmem [shape: f32[128,128], index: 5, kind: input, shape index: {}]
  %s6 = inlined_call_operand.vmem [shape: f32[128,128], index: 6, kind: input, shape index: {}]
  %s7 = inlined_call_operand.vmem [shape: f32[1,128], index: 7, kind: input, shape index: {}]
  %s8 = inlined_call_operand.vmem [shape: f32[128,128], index: 8, kind: input, shape index: {}]
  %s9 = inlined_call_operand.vmem [shape: f32[1,128], index: 9, kind: input, shape index: {}]
  %s10 = inlined_call_operand.hbm [shape: f32[64,64], index: 10, kind: input, shape index: {}]
  %s11 = inlined_call_operand.vmem [shape: f32[128,64], index: 11, kind: input, shape index: {}]
  %s12 = inlined_call_operand.vmem [shape: f32[1,64], index: 12, kind: input, shape index: {}]
  %s13 = inlined_call_operand.hbm [shape: f32[64,64], index: 13, kind: input, shape index: {}]
  %s14 = inlined_call_operand.vmem [shape: f32[1,64], index: 14, kind: input, shape index: {}]
  %s15 = inlined_call_operand.hbm [shape: f32[64,128], index: 15, kind: input, shape index: {}]
  %s16 = inlined_call_operand.vmem [shape: f32[1,128], index: 16, kind: input, shape index: {}]
  %s17 = inlined_call_operand.vmem [shape: f32[2,128], index: 17, kind: output, shape index: {0}]
  %s18 = inlined_call_operand.hbm [shape: f32[2,64], index: 18, kind: output, shape index: {1}]
  %s19 = inlined_call_operand.hbm [shape: f32[1,1], index: 19, kind: output, shape index: {2}]
  %s20 = inlined_call_operand.hbm [shape: f32[1,1], index: 20, kind: output, shape index: {3}]
  %21 = xla_tuple %s17, %s18, %s19, %s20
  %s22 = sld [smem:[#allocation0]]
  $region118: #{task_cvae2_forward.1} parent=0
    _
  %s24 = ssub.s32 1, %s22
  %s25 = scalar_select 0, %s24, %s22
  $region1: #{task_cvae2_forward.1} parent=0
    #allocation2 [shape = 'u8[524288]{0}', space=vmem, size = 0x80000, scoped, tag = 'input window, operand 3, single buffered']
    #allocation3 [shape = 's32[1]{0}', space=sflag, size = 0x4, scoped, tag = 'scoped memory for task_cvae2_forward.1']
    #allocation4 [shape = 's32[1]{0}', space=sflag, size = 0x4, scoped, tag = 'scoped memory for task_cvae2_forward.1']
    #allocation5 [shape = 'u8[32768]{0}', space=vmem, size = 0x8000, scoped, tag = 'input window, operand 10, single buffered']
    #allocation6 [shape = 's32[1]{0}', space=sflag, size = 0x4, scoped, tag = 'scoped memory for task_cvae2_forward.1']
    #allocation7 [shape = 'u8[32768]{0}', space=vmem, size = 0x8000, scoped, tag = 'input window, operand 13, single buffered']
    #allocation8 [shape = 'u8[32768]{0}', space=vmem, size = 0x8000, scoped, tag = 'input window, operand 15, single buffered']
    #allocation9 [shape = 's32[1]{0}', space=sflag, size = 0x4, scoped, tag = 'scoped memory for task_cvae2_forward.1']
    #allocation10 [shape = 'u8[1024]{0}', space=vmem, size = 0x400, scoped, tag = 'output window, operand 1, single buffered']
    #allocation11 [shape = 'u8[512]{0}', space=vmem, size = 0x400, scoped, tag = 'output window, operand 2, single buffered']
    #allocation12 [shape = 's32[1]{0}', space=sflag, size = 0x4, scoped, tag = 'scoped memory for task_cvae2_forward.1']
    #allocation13 [shape = 'u8[512]{0}', space=vmem, size = 0x400, scoped, tag = 'output window, operand 3, single buffered']
    %26 = vsyncpa [#allocation3], 0
    %27 = vsyncpa [#allocation6], 0
    %28 = vsyncpa [#allocation9], 0
    %29 = vsyncpa [#allocation4], 0
    %30 = vsyncpa [#allocation12], 0
    // Predicated region
    $region2: #{task_cvae2_forward.1} parent=1 // pred_check
      _
    $region3: #{task_cvae2_forward.1} parent=1 // pred_check_branch
      %32 = sbr.rel (0) target = $region5
    $region4: #{task_cvae2_forward.1} parent=1 // pred_region
      _
    $region5: #{task_cvae2_forward.1} parent=1 // pred_fallthru
      _
    // Predicated region
    $region6: #{task_cvae2_forward.1} parent=1 // pred_check
      _
    $region7: #{task_cvae2_forward.1} parent=1 // pred_check_branch
      %34 = sbr.rel (0) target = $region9
    $region8: #{task_cvae2_forward.1} parent=1 // pred_region
      _
    $region9: #{task_cvae2_forward.1} parent=1 // pred_fallthru
      _
    // Predicated region
    $region10: #{task_cvae2_forward.1} parent=1 // pred_check
      _
    $region11: #{task_cvae2_forward.1} parent=1 // pred_check_branch
      %36 = sbr.rel (0) target = $region13
    $region12: #{task_cvae2_forward.1} parent=1 // pred_region
      _
    $region13: #{task_cvae2_forward.1} parent=1 // pred_fallthru
      _
    // Predicated region
    $region14: #{task_cvae2_forward.1} parent=1 // pred_check
      _
    $region15: #{task_cvae2_forward.1} parent=1 // pred_check_branch
      %38 = sbr.rel (0) target = $region17
    $region16: #{task_cvae2_forward.1} parent=1 // pred_region
      %s40 = ssub.s32 16384, 16384
      %41 = vsyncadd [#allocation3], %s40
      %s42 = sshll.u32 [#allocation2], 4
      %s43 = int_to_ptr.vmem [resolvable:$true] %s42
      %48 = dma.hbm_to_vmem [thread:$0]  %s3, 16384, %s43, [#allocation3], 128, 128, 8
    $region17: #{task_cvae2_forward.1} parent=1 // pred_fallthru
      _
    // Predicated region
    $region18: #{task_cvae2_forward.1} parent=1 // pred_check
      _
    $region19: #{task_cvae2_forward.1} parent=1 // pred_check_branch
      %50 = sbr.rel (0) target = $region21
    $region20: #{task_cvae2_forward.1} parent=1 // pred_region
      _
    $region21: #{task_cvae2_forward.1} parent=1 // pred_fallthru
      _
    // Predicated region
    $region22: #{task_cvae2_forward.1} parent=1 // pred_check
      _
    $region23: #{task_cvae2_forward.1} parent=1 // pred_check_branch
      %52 = sbr.rel (0) target = $region25
    $region24: #{task_cvae2_forward.1} parent=1 // pred_region
      _
    $region25: #{task_cvae2_forward.1} parent=1 // pred_fallthru
      _
    // Predicated region
    $region26: #{task_cvae2_forward.1} parent=1 // pred_check
      _
    $region27: #{task_cvae2_forward.1} parent=1 // pred_check_branch
      %54 = sbr.rel (0) target = $region29
    $region28: #{task_cvae2_forward.1} parent=1 // pred_region
      _
    $region29: #{task_cvae2_forward.1} parent=1 // pred_fallthru
      _
    // Predicated region
    $region30: #{task_cvae2_forward.1} parent=1 // pred_check
      _
    $region31: #{task_cvae2_forward.1} parent=1 // pred_check_branch
      %56 = sbr.rel (0) target = $region33
    $region32: #{task_cvae2_forward.1} parent=1 // pred_region
      _
    $region33: #{task_cvae2_forward.1} parent=1 // pred_fallthru
      _
    // Predicated region
    $region34: #{task_cvae2_forward.1} parent=1 // pred_check
      _
    $region35: #{task_cvae2_forward.1} parent=1 // pred_check_branch
      %58 = sbr.rel (0) target = $region37
    $region36: #{task_cvae2_forward.1} parent=1 // pred_region
      _
    $region37: #{task_cvae2_forward.1} parent=1 // pred_fallthru
      _
    // Predicated region
    $region38: #{task_cvae2_forward.1} parent=1 // pred_check
      _
    $region39: #{task_cvae2_forward.1} parent=1 // pred_check_branch
      %60 = sbr.rel (0) target = $region41
    $region40: #{task_cvae2_forward.1} parent=1 // pred_region
      _
    $region41: #{task_cvae2_forward.1} parent=1 // pred_fallthru
      _
    // Predicated region
    $region42: #{task_cvae2_forward.1} parent=1 // pred_check
      _
    $region43: #{task_cvae2_forward.1} parent=1 // pred_check_branch
      %62 = sbr.rel (0) target = $region45
    $region44: #{task_cvae2_forward.1} parent=1 // pred_region
      %s64 = ssub.s32 1024, 1024
      %65 = vsyncadd [#allocation6], %s64
      %s66 = sshll.u32 [#allocation5], 4
      %s67 = int_to_ptr.vmem [resolvable:$true] %s66
      %72 = dma.hbm_to_vmem [thread:$0]  %s10, 1024, %s67, [#allocation6], 128, 128, 8
    $region45: #{task_cvae2_forward.1} parent=1 // pred_fallthru
      _
    // Predicated region
    $region46: #{task_cvae2_forward.1} parent=1 // pred_check
      _
    $region47: #{task_cvae2_forward.1} parent=1 // pred_check_branch
      %74 = sbr.rel (0) target = $region49
    $region48: #{task_cvae2_forward.1} parent=1 // pred_region
      _
    $region49: #{task_cvae2_forward.1} parent=1 // pred_fallthru
      _
    // Predicated region
    $region50: #{task_cvae2_forward.1} parent=1 // pred_check
      _
    $region51: #{task_cvae2_forward.1} parent=1 // pred_check_branch
      %76 = sbr.rel (0) target = $region53
    $region52: #{task_cvae2_forward.1} parent=1 // pred_region
      _
    $region53: #{task_cvae2_forward.1} parent=1 // pred_fallthru
      _
    // Predicated region
    $region54: #{task_cvae2_forward.1} parent=1 // pred_check
      _
    $region55: #{task_cvae2_forward.1} parent=1 // pred_check_branch
      %78 = sbr.rel (0) target = $region57
    $region56: #{task_cvae2_forward.1} parent=1 // pred_region
      %s80 = ssub.s32 1024, 1024
      %81 = vsyncadd [#allocation6], %s80
      %s82 = sshll.u32 [#allocation7], 4
      %s83 = int_to_ptr.vmem [resolvable:$true] %s82
      %88 = dma.hbm_to_vmem [thread:$0]  %s13, 1024, %s83, [#allocation6], 128, 128, 8
    $region57: #{task_cvae2_forward.1} parent=1 // pred_fallthru
      _
    // Predicated region
    $region58: #{task_cvae2_forward.1} parent=1 // pred_check
      _
    $region59: #{task_cvae2_forward.1} parent=1 // pred_check_branch
      %90 = sbr.rel (0) target = $region61
    $region60: #{task_cvae2_forward.1} parent=1 // pred_region
      _
    $region61: #{task_cvae2_forward.1} parent=1 // pred_fallthru
      _
    // Predicated region
    $region62: #{task_cvae2_forward.1} parent=1 // pred_check
      _
    $region63: #{task_cvae2_forward.1} parent=1 // pred_check_branch
      %92 = sbr.rel (0) target = $region65
    $region64: #{task_cvae2_forward.1} parent=1 // pred_region
      %s94 = ssub.s32 1024, 1024
      %95 = vsyncadd [#allocation9], %s94
      %s96 = sshll.u32 [#allocation8], 4
      %s97 = int_to_ptr.vmem [resolvable:$true] %s96
      %102 = dma.hbm_to_vmem [thread:$0]  %s15, 1024, %s97, [#allocation9], 128, 128, 8
    $region65: #{task_cvae2_forward.1} parent=1 // pred_fallthru
      _
    // Predicated region
    $region66: #{task_cvae2_forward.1} parent=1 // pred_check
      _
    $region67: #{task_cvae2_forward.1} parent=1 // pred_check_branch
      %104 = sbr.rel (0) target = $region69
    $region68: #{task_cvae2_forward.1} parent=1 // pred_region
      _
    $region69: #{task_cvae2_forward.1} parent=1 // pred_fallthru
      _
    // Predicated region
    $region70: #{task_cvae2_forward.1} parent=1 // pred_check
      _
    $region71: #{task_cvae2_forward.1} parent=1 // pred_check_branch
      %106 = sbr.rel (0) target = $region73
    $region72: #{task_cvae2_forward.1} parent=1 // pred_region
      %107 = dma.done [#allocation3], 16384
    $region73: #{task_cvae2_forward.1} parent=1 // pred_fallthru
      _
    // Predicated region
    $region74: #{task_cvae2_forward.1} parent=1 // pred_check
      _
    $region75: #{task_cvae2_forward.1} parent=1 // pred_check_branch
      %109 = sbr.rel (0) target = $region77
    $region76: #{task_cvae2_forward.1} parent=1 // pred_region
      %110 = dma.done [#allocation6], 1024
    $region77: #{task_cvae2_forward.1} parent=1 // pred_fallthru
      _
    // Predicated region
    $region78: #{task_cvae2_forward.1} parent=1 // pred_check
      _
    $region79: #{task_cvae2_forward.1} parent=1 // pred_check_branch
      %112 = sbr.rel (0) target = $region81
    $region80: #{task_cvae2_forward.1} parent=1 // pred_region
      %113 = dma.done [#allocation6], 1024
    $region81: #{task_cvae2_forward.1} parent=1 // pred_fallthru
      _
    // Predicated region
    $region82: #{task_cvae2_forward.1} parent=1 // pred_check
      _
    $region83: #{task_cvae2_forward.1} parent=1 // pred_check_branch
      %115 = sbr.rel (0) target = $region85
    $region84: #{task_cvae2_forward.1} parent=1 // pred_region
      %116 = dma.done [#allocation9], 1024
    $region85: #{task_cvae2_forward.1} parent=1 // pred_fallthru
      _
    %v117 = vld [vmem:[%s0] sm:$0xff]
    %v118 = vld [vmem:[%s0 + $0x8] sm:$0xff]
    %v119 = vld [vmem:[#allocation2] sm:$0xff]
    %v120 = vld [vmem:[#allocation2 + $0x8] sm:$0xff]
    %v121 = vld [vmem:[#allocation2 + $0x10] sm:$0xff]
    %v122 = vld [vmem:[#allocation2 + $0x18] sm:$0xff]
    %v123 = vld [vmem:[#allocation2 + $0x20] sm:$0xff]
    %v124 = vld [vmem:[#allocation2 + $0x28] sm:$0xff]
    %v125 = vld [vmem:[#allocation2 + $0x30] sm:$0xff]
    %v126 = vld [vmem:[#allocation2 + $0x38] sm:$0xff]
    %v127 = vld [vmem:[#allocation2 + $0x40] sm:$0xff]
    %v128 = vld [vmem:[#allocation2 + $0x48] sm:$0xff]
    %v129 = vld [vmem:[#allocation2 + $0x50] sm:$0xff]
    %v130 = vld [vmem:[#allocation2 + $0x58] sm:$0xff]
    %v131 = vld [vmem:[#allocation2 + $0x60] sm:$0xff]
    %v132 = vld [vmem:[#allocation2 + $0x68] sm:$0xff]
    %v133 = vld [vmem:[#allocation2 + $0x70] sm:$0xff]
    %v134 = vld [vmem:[#allocation2 + $0x78] sm:$0xff]
    %v135 = vld [vmem:[#allocation2 + $0x80] sm:$0xff]
    %v136 = vld [vmem:[#allocation2 + $0x88] sm:$0xff]
    %v137 = vld [vmem:[#allocation2 + $0x90] sm:$0xff]
    %v138 = vld [vmem:[#allocation2 + $0x98] sm:$0xff]
    %v139 = vld [vmem:[#allocation2 + $0xa0] sm:$0xff]
    %v140 = vld [vmem:[#allocation2 + $0xa8] sm:$0xff]
    %v141 = vld [vmem:[#allocation2 + $0xb0] sm:$0xff]
    %v142 = vld [vmem:[#allocation2 + $0xb8] sm:$0xff]
    %v143 = vld [vmem:[#allocation2 + $0xc0] sm:$0xff]
    %v144 = vld [vmem:[#allocation2 + $0xc8] sm:$0xff]
    %v145 = vld [vmem:[#allocation2 + $0xd0] sm:$0xff]
    %v146 = vld [vmem:[#allocation2 + $0xd8] sm:$0xff]
    %v147 = vld [vmem:[#allocation2 + $0xe0] sm:$0xff]
    %v148 = vld [vmem:[#allocation2 + $0xe8] sm:$0xff]
    %v149 = vld [vmem:[#allocation2 + $0xf0] sm:$0xff]
    %v150 = vld [vmem:[#allocation2 + $0xf8] sm:$0xff]
    %v151 = vld [vmem:[#allocation2 + $0x100] sm:$0xff]
    %v152 = vld [vmem:[#allocation2 + $0x108] sm:$0xff]
    %v153 = vld [vmem:[#allocation2 + $0x110] sm:$0xff]
    %v154 = vld [vmem:[#allocation2 + $0x118] sm:$0xff]
    %v155 = vld [vmem:[#allocation2 + $0x120] sm:$0xff]
    %v156 = vld [vmem:[#allocation2 + $0x128] sm:$0xff]
    %v157 = vld [vmem:[#allocation2 + $0x130] sm:$0xff]
    %v158 = vld [vmem:[#allocation2 + $0x138] sm:$0xff]
    %v159 = vld [vmem:[#allocation2 + $0x140] sm:$0xff]
    %v160 = vld [vmem:[#allocation2 + $0x148] sm:$0xff]
    %v161 = vld [vmem:[#allocation2 + $0x150] sm:$0xff]
    %v162 = vld [vmem:[#allocation2 + $0x158] sm:$0xff]
    %v163 = vld [vmem:[#allocation2 + $0x160] sm:$0xff]
    %v164 = vld [vmem:[#allocation2 + $0x168] sm:$0xff]
    %v165 = vld [vmem:[#allocation2 + $0x170] sm:$0xff]
    %v166 = vld [vmem:[#allocation2 + $0x178] sm:$0xff]
    %v167 = vld [vmem:[#allocation2 + $0x180] sm:$0xff]
    %v168 = vld [vmem:[#allocation2 + $0x188] sm:$0xff]
    %v169 = vld [vmem:[#allocation2 + $0x190] sm:$0xff]
    %v170 = vld [vmem:[#allocation2 + $0x198] sm:$0xff]
    %v171 = vld [vmem:[#allocation2 + $0x1a0] sm:$0xff]
    %v172 = vld [vmem:[#allocation2 + $0x1a8] sm:$0xff]
    %v173 = vld [vmem:[#allocation2 + $0x1b0] sm:$0xff]
    %v174 = vld [vmem:[#allocation2 + $0x1b8] sm:$0xff]
    %v175 = vld [vmem:[#allocation2 + $0x1c0] sm:$0xff]
    %v176 = vld [vmem:[#allocation2 + $0x1c8] sm:$0xff]
    %v177 = vld [vmem:[#allocation2 + $0x1d0] sm:$0xff]
    %v178 = vld [vmem:[#allocation2 + $0x1d8] sm:$0xff]
    %v179 = vld [vmem:[#allocation2 + $0x1e0] sm:$0xff]
    %v180 = vld [vmem:[#allocation2 + $0x1e8] sm:$0xff]
    %v181 = vld [vmem:[#allocation2 + $0x1f0] sm:$0xff]
    %v182 = vld [vmem:[#allocation2 + $0x1f8] sm:$0xff]
    %v183 = vld [vmem:[#allocation2 + $0x200] sm:$0xff]
    %v184 = vld [vmem:[#allocation2 + $0x208] sm:$0xff]
    %v185 = vld [vmem:[#allocation2 + $0x210] sm:$0xff]
    %v186 = vld [vmem:[#allocation2 + $0x218] sm:$0xff]
    %v187 = vld [vmem:[#allocation2 + $0x220] sm:$0xff]
    %v188 = vld [vmem:[#allocation2 + $0x228] sm:$0xff]
    %v189 = vld [vmem:[#allocation2 + $0x230] sm:$0xff]
    %v190 = vld [vmem:[#allocation2 + $0x238] sm:$0xff]
    %v191 = vld [vmem:[#allocation2 + $0x240] sm:$0xff]
    %v192 = vld [vmem:[#allocation2 + $0x248] sm:$0xff]
    %v193 = vld [vmem:[#allocation2 + $0x250] sm:$0xff]
    %v194 = vld [vmem:[#allocation2 + $0x258] sm:$0xff]
    %v195 = vld [vmem:[#allocation2 + $0x260] sm:$0xff]
    %v196 = vld [vmem:[#allocation2 + $0x268] sm:$0xff]
    %v197 = vld [vmem:[#allocation2 + $0x270] sm:$0xff]
    %v198 = vld [vmem:[#allocation2 + $0x278] sm:$0xff]
    %v199 = vld [vmem:[#allocation2 + $0x280] sm:$0xff]
    %v200 = vld [vmem:[#allocation2 + $0x288] sm:$0xff]
    %v201 = vld [vmem:[#allocation2 + $0x290] sm:$0xff]
    %v202 = vld [vmem:[#allocation2 + $0x298] sm:$0xff]
    %v203 = vld [vmem:[#allocation2 + $0x2a0] sm:$0xff]
    %v204 = vld [vmem:[#allocation2 + $0x2a8] sm:$0xff]
    %v205 = vld [vmem:[#allocation2 + $0x2b0] sm:$0xff]
    %v206 = vld [vmem:[#allocation2 + $0x2b8] sm:$0xff]
    %v207 = vld [vmem:[#allocation2 + $0x2c0] sm:$0xff]
    %v208 = vld [vmem:[#allocation2 + $0x2c8] sm:$0xff]
    %v209 = vld [vmem:[#allocation2 + $0x2d0] sm:$0xff]
    %v210 = vld [vmem:[#allocation2 + $0x2d8] sm:$0xff]
    %v211 = vld [vmem:[#allocation2 + $0x2e0] sm:$0xff]
    %v212 = vld [vmem:[#allocation2 + $0x2e8] sm:$0xff]
    %v213 = vld [vmem:[#allocation2 + $0x2f0] sm:$0xff]
    %v214 = vld [vmem:[#allocation2 + $0x2f8] sm:$0xff]
    %v215 = vld [vmem:[#allocation2 + $0x300] sm:$0xff]
    %v216 = vld [vmem:[#allocation2 + $0x308] sm:$0xff]
    %v217 = vld [vmem:[#allocation2 + $0x310] sm:$0xff]
    %v218 = vld [vmem:[#allocation2 + $0x318] sm:$0xff]
    %v219 = vld [vmem:[#allocation2 + $0x320] sm:$0xff]
    %v220 = vld [vmem:[#allocation2 + $0x328] sm:$0xff]
    %v221 = vld [vmem:[#allocation2 + $0x330] sm:$0xff]
    %v222 = vld [vmem:[#allocation2 + $0x338] sm:$0xff]
    %v223 = vld [vmem:[#allocation2 + $0x340] sm:$0xff]
    %v224 = vld [vmem:[#allocation2 + $0x348] sm:$0xff]
    %v225 = vld [vmem:[#allocation2 + $0x350] sm:$0xff]
    %v226 = vld [vmem:[#allocation2 + $0x358] sm:$0xff]
    %v227 = vld [vmem:[#allocation2 + $0x360] sm:$0xff]
    %v228 = vld [vmem:[#allocation2 + $0x368] sm:$0xff]
    %v229 = vld [vmem:[#allocation2 + $0x370] sm:$0xff]
    %v230 = vld [vmem:[#allocation2 + $0x378] sm:$0xff]
    %v231 = vld [vmem:[#allocation2 + $0x380] sm:$0xff]
    %v232 = vld [vmem:[#allocation2 + $0x388] sm:$0xff]
    %v233 = vld [vmem:[#allocation2 + $0x390] sm:$0xff]
    %v234 = vld [vmem:[#allocation2 + $0x398] sm:$0xff]
    %v235 = vld [vmem:[#allocation2 + $0x3a0] sm:$0xff]
    %v236 = vld [vmem:[#allocation2 + $0x3a8] sm:$0xff]
    %v237 = vld [vmem:[#allocation2 + $0x3b0] sm:$0xff]
    %v238 = vld [vmem:[#allocation2 + $0x3b8] sm:$0xff]
    %v239 = vld [vmem:[#allocation2 + $0x3c0] sm:$0xff]
    %v240 = vld [vmem:[#allocation2 + $0x3c8] sm:$0xff]
    %v241 = vld [vmem:[#allocation2 + $0x3d0] sm:$0xff]
    %v242 = vld [vmem:[#allocation2 + $0x3d8] sm:$0xff]
    %v243 = vld [vmem:[#allocation2 + $0x3e0] sm:$0xff]
    %v244 = vld [vmem:[#allocation2 + $0x3e8] sm:$0xff]
    %v245 = vld [vmem:[#allocation2 + $0x3f0] sm:$0xff]
    %v246 = vld [vmem:[#allocation2 + $0x3f8] sm:$0xff]
    %v247 = vld [vmem:[%s4] sm:$0x1]
    %v249 = vlaneseq
    %v250 = vshrl.u32 %v249, 7
    %v251 = vsub.s32 0, %v250
    %v252 = vrot.slane %v247, %v251
    %v256 = vcombine.high %v117, %v117
    %v258 = vunpack.c.l.s4 1983009808
    %v259 = vunpack.c.0.s8 %v258
    %v260 = vlaneseq
    %v261 = vshrl.u32 %v260, 7
    %v262 = vsub.s32 %v259, %v261
    %v263 = vrot.slane %v117, %v262
    %v265 = vunpack.c.l.s4 1983009808
    %v266 = vunpack.c.0.s8 %v265
    %v267 = vlaneseq
    %v268 = vshrl.u32 %v267, 7
    %v269 = vsub.s32 %v266, %v268
    %v270 = vrot.slane %v256, %v269
    %v271 = vcombine.high %v263, %v263
    %v272 = vcombine.high %v270, %v270
    %v273 = vcombine.high %v118, %v118
    %v275 = vunpack.c.l.s4 1983009808
    %v276 = vunpack.c.0.s8 %v275
    %v277 = vlaneseq
    %v278 = vshrl.u32 %v277, 7
    %v279 = vsub.s32 %v276, %v278
    %v280 = vrot.slane %v118, %v279
    %v282 = vunpack.c.l.s4 1983009808
    %v283 = vunpack.c.0.s8 %v282
    %v284 = vlaneseq
    %v285 = vshrl.u32 %v284, 7
    %v286 = vsub.s32 %v283, %v285
    %v287 = vrot.slane %v273, %v286
    %v288 = vcombine.high %v280, %v280
    %v289 = vcombine.high %v287, %v287
    %298 = vmatprep.subr.mxu0 0.0
    %299 = vmatpush1.msra.mxu0 %v119
    %300 = vmatprep.subr.mxu0 0.0
    %301 = vmatpush1.msra.mxu0 %v120
    %302 = vmatprep.subr.mxu0 0.0
    %303 = vmatpush1.msra.mxu0 %v121
    %304 = vmatprep.subr.mxu0 0.0
    %305 = vmatpush1.msra.mxu0 %v122
    %306 = vmatprep.subr.mxu0 0.0
    %307 = vmatpush1.msra.mxu0 %v123
    %308 = vmatprep.subr.mxu0 0.0
    %309 = vmatpush1.msra.mxu0 %v124
    %310 = vmatprep.subr.mxu0 0.0
    %311 = vmatpush1.msra.mxu0 %v125
    %312 = vmatprep.subr.mxu0 0.0
    %313 = vmatpush1.msra.mxu0 %v126
    %314 = vmatprep.subr.mxu0 0.0
    %315 = vmatpush1.msra.mxu0 %v127
    %316 = vmatprep.subr.mxu0 0.0
    %317 = vmatpush1.msra.mxu0 %v128
    %318 = vmatprep.subr.mxu0 0.0
    %319 = vmatpush1.msra.mxu0 %v129
    %320 = vmatprep.subr.mxu0 0.0
    %321 = vmatpush1.msra.mxu0 %v130
    %322 = vmatprep.subr.mxu0 0.0
    %323 = vmatpush1.msra.mxu0 %v131
    %324 = vmatprep.subr.mxu0 0.0
    %325 = vmatpush1.msra.mxu0 %v132
    %326 = vmatprep.subr.mxu0 0.0
    %327 = vmatpush1.msra.mxu0 %v133
    %328 = vmatprep.subr.mxu0 0.0
    %329 = vmatpush1.msra.mxu0 %v134
    %330 = vmatprep.subr.mxu0 0.0
    %331 = vmatpush1.msra.mxu0 %v135
    %332 = vmatprep.subr.mxu0 0.0
    %333 = vmatpush1.msra.mxu0 %v136
    %334 = vmatprep.subr.mxu0 0.0
    %335 = vmatpush1.msra.mxu0 %v137
    %336 = vmatprep.subr.mxu0 0.0
    %337 = vmatpush1.msra.mxu0 %v138
    %338 = vmatprep.subr.mxu0 0.0
    %339 = vmatpush1.msra.mxu0 %v139
    %340 = vmatprep.subr.mxu0 0.0
    %341 = vmatpush1.msra.mxu0 %v140
    %342 = vmatprep.subr.mxu0 0.0
    %343 = vmatpush1.msra.mxu0 %v141
    %344 = vmatprep.subr.mxu0 0.0
    %345 = vmatpush1.msra.mxu0 %v142
    %346 = vmatprep.subr.mxu0 0.0
    %347 = vmatpush1.msra.mxu0 %v143
    %348 = vmatprep.subr.mxu0 0.0
    %349 = vmatpush1.msra.mxu0 %v144
    %350 = vmatprep.subr.mxu0 0.0
    %351 = vmatpush1.msra.mxu0 %v145
    %352 = vmatprep.subr.mxu0 0.0
    %353 = vmatpush1.msra.mxu0 %v146
    %354 = vmatprep.subr.mxu0 0.0
    %355 = vmatpush1.msra.mxu0 %v147
    %356 = vmatprep.subr.mxu0 0.0
    %357 = vmatpush1.msra.mxu0 %v148
    %358 = vmatprep.subr.mxu0 0.0
    %359 = vmatpush1.msra.mxu0 %v149
    %360 = vmatprep.subr.mxu0 0.0
    %361 = vmatpush1.msra.mxu0 %v150
    %362 = vmatprep.mubr.f32.mxu0 %v271
    %363 = vmatmul.mubr.f32.gmra.mrb[0].mxu0 %v263
    %v364 = vpop.f32.mrb[0].mxu0
    %v365 = vadd.f32 %v252, %v364
    %v366 = vpop.f32.mrb[0].mxu0
    %367 = vdwg.mxu0
    %368 = vmatprep.subr.mxu0 0.0
    %369 = vmatpush1.msra.mxu0 %v151
    %370 = vmatprep.subr.mxu0 0.0
    %371 = vmatpush1.msra.mxu0 %v152
    %372 = vmatprep.subr.mxu0 0.0
    %373 = vmatpush1.msra.mxu0 %v153
    %374 = vmatprep.subr.mxu0 0.0
    %375 = vmatpush1.msra.mxu0 %v154
    %376 = vmatprep.subr.mxu0 0.0
    %377 = vmatpush1.msra.mxu0 %v155
    %378 = vmatprep.subr.mxu0 0.0
    %379 = vmatpush1.msra.mxu0 %v156
    %380 = vmatprep.subr.mxu0 0.0
    %381 = vmatpush1.msra.mxu0 %v157
    %382 = vmatprep.subr.mxu0 0.0
    %383 = vmatpush1.msra.mxu0 %v158
    %384 = vmatprep.subr.mxu0 0.0
    %385 = vmatpush1.msra.mxu0 %v159
    %386 = vmatprep.subr.mxu0 0.0
    %387 = vmatpush1.msra.mxu0 %v160
    %388 = vmatprep.subr.mxu0 0.0
    %389 = vmatpush1.msra.mxu0 %v161
    %390 = vmatprep.subr.mxu0 0.0
    %391 = vmatpush1.msra.mxu0 %v162
    %392 = vmatprep.subr.mxu0 0.0
    %393 = vmatpush1.msra.mxu0 %v163
    %394 = vmatprep.subr.mxu0 0.0
    %395 = vmatpush1.msra.mxu0 %v164
    %396 = vmatprep.subr.mxu0 0.0
    %397 = vmatpush1.msra.mxu0 %v165
    %398 = vmatprep.subr.mxu0 0.0
    %399 = vmatpush1.msra.mxu0 %v166
    %400 = vmatprep.subr.mxu0 0.0
    %401 = vmatpush1.msra.mxu0 %v167
    %402 = vmatprep.subr.mxu0 0.0
    %403 = vmatpush1.msra.mxu0 %v168
    %404 = vmatprep.subr.mxu0 0.0
    %405 = vmatpush1.msra.mxu0 %v169
    %406 = vmatprep.subr.mxu0 0.0
    %407 = vmatpush1.msra.mxu0 %v170
    %408 = vmatprep.subr.mxu0 0.0
    %409 = vmatpush1.msra.mxu0 %v171
    %410 = vmatprep.subr.mxu0 0.0
    %411 = vmatpush1.msra.mxu0 %v172
    %412 = vmatprep.subr.mxu0 0.0
    %413 = vmatpush1.msra.mxu0 %v173
    %414 = vmatprep.subr.mxu0 0.0
    %415 = vmatpush1.msra.mxu0 %v174
    %416 = vmatprep.subr.mxu0 0.0
    %417 = vmatpush1.msra.mxu0 %v175
    %418 = vmatprep.subr.mxu0 0.0
    %419 = vmatpush1.msra.mxu0 %v176
    %420 = vmatprep.subr.mxu0 0.0
    %421 = vmatpush1.msra.mxu0 %v177
    %422 = vmatprep.subr.mxu0 0.0
    %423 = vmatpush1.msra.mxu0 %v178
    %424 = vmatprep.subr.mxu0 0.0
    %425 = vmatpush1.msra.mxu0 %v179
    %426 = vmatprep.subr.mxu0 0.0
    %427 = vmatpush1.msra.mxu0 %v180
    %428 = vmatprep.subr.mxu0 0.0
    %429 = vmatpush1.msra.mxu0 %v181
    %430 = vmatprep.subr.mxu0 0.0
    %431 = vmatpush1.msra.mxu0 %v182
    %432 = vmatprep.mubr.f32.mxu0 %v272
    %433 = vmatmul.mubr.f32.gmra.mrb[0].mxu0 %v270
    %v434 = vpop.f32.mrb[0].mxu0
    %v435 = vadd.f32 %v365, %v434
    %v436 = vpop.f32.mrb[0].mxu0
    %437 = vdwg.mxu0
    %438 = vmatprep.subr.mxu0 0.0
    %439 = vmatpush1.msra.mxu0 %v183
    %440 = vmatprep.subr.mxu0 0.0
    %441 = vmatpush1.msra.mxu0 %v184
    %442 = vmatprep.subr.mxu0 0.0
    %443 = vmatpush1.msra.mxu0 %v185
    %444 = vmatprep.subr.mxu0 0.0
    %445 = vmatpush1.msra.mxu0 %v186
    %446 = vmatprep.subr.mxu0 0.0
    %447 = vmatpush1.msra.mxu0 %v187
    %448 = vmatprep.subr.mxu0 0.0
    %449 = vmatpush1.msra.mxu0 %v188
    %450 = vmatprep.subr.mxu0 0.0
    %451 = vmatpush1.msra.mxu0 %v189
    %452 = vmatprep.subr.mxu0 0.0
    %453 = vmatpush1.msra.mxu0 %v190
    %454 = vmatprep.subr.mxu0 0.0
    %455 = vmatpush1.msra.mxu0 %v191
    %456 = vmatprep.subr.mxu0 0.0
    %457 = vmatpush1.msra.mxu0 %v192
    %458 = vmatprep.subr.mxu0 0.0
    %459 = vmatpush1.msra.mxu0 %v193
    %460 = vmatprep.subr.mxu0 0.0
    %461 = vmatpush1.msra.mxu0 %v194
    %462 = vmatprep.subr.mxu0 0.0
    %463 = vmatpush1.msra.mxu0 %v195
    %464 = vmatprep.subr.mxu0 0.0
    %465 = vmatpush1.msra.mxu0 %v196
    %466 = vmatprep.subr.mxu0 0.0
    %467 = vmatpush1.msra.mxu0 %v197
    %468 = vmatprep.subr.mxu0 0.0
    %469 = vmatpush1.msra.mxu0 %v198
    %470 = vmatprep.subr.mxu0 0.0
    %471 = vmatpush1.msra.mxu0 %v199
    %472 = vmatprep.subr.mxu0 0.0
    %473 = vmatpush1.msra.mxu0 %v200
    %474 = vmatprep.subr.mxu0 0.0
    %475 = vmatpush1.msra.mxu0 %v201
    %476 = vmatprep.subr.mxu0 0.0
    %477 = vmatpush1.msra.mxu0 %v202
    %478 = vmatprep.subr.mxu0 0.0
    %479 = vmatpush1.msra.mxu0 %v203
    %480 = vmatprep.subr.mxu0 0.0
    %481 = vmatpush1.msra.mxu0 %v204
    %482 = vmatprep.subr.mxu0 0.0
    %483 = vmatpush1.msra.mxu0 %v205
    %484 = vmatprep.subr.mxu0 0.0
    %485 = vmatpush1.msra.mxu0 %v206
    %486 = vmatprep.subr.mxu0 0.0
    %487 = vmatpush1.msra.mxu0 %v207
    %488 = vmatprep.subr.mxu0 0.0
    %489 = vmatpush1.msra.mxu0 %v208
    %490 = vmatprep.subr.mxu0 0.0
    %491 = vmatpush1.msra.mxu0 %v209
    %492 = vmatprep.subr.mxu0 0.0
    %493 = vmatpush1.msra.mxu0 %v210
    %494 = vmatprep.subr.mxu0 0.0
    %495 = vmatpush1.msra.mxu0 %v211
    %496 = vmatprep.subr.mxu0 0.0
    %497 = vmatpush1.msra.mxu0 %v212
    %498 = vmatprep.subr.mxu0 0.0
    %499 = vmatpush1.msra.mxu0 %v213
    %500 = vmatprep.subr.mxu0 0.0
    %501 = vmatpush1.msra.mxu0 %v214
    %502 = vmatprep.mubr.f32.mxu0 %v288
    %503 = vmatmul.mubr.f32.gmra.mrb[0].mxu0 %v280
    %v504 = vpop.f32.mrb[0].mxu0
    %v505 = vadd.f32 %v435, %v504
    %v506 = vpop.f32.mrb[0].mxu0
    %507 = vdwg.mxu0
    %508 = vmatprep.subr.mxu0 0.0
    %509 = vmatpush1.msra.mxu0 %v215
    %510 = vmatprep.subr.mxu0 0.0
    %511 = vmatpush1.msra.mxu0 %v216
    %512 = vmatprep.subr.mxu0 0.0
    %513 = vmatpush1.msra.mxu0 %v217
    %514 = vmatprep.subr.mxu0 0.0
    %515 = vmatpush1.msra.mxu0 %v218
    %516 = vmatprep.subr.mxu0 0.0
    %517 = vmatpush1.msra.mxu0 %v219
    %518 = vmatprep.subr.mxu0 0.0
    %519 = vmatpush1.msra.mxu0 %v220
    %520 = vmatprep.subr.mxu0 0.0
    %521 = vmatpush1.msra.mxu0 %v221
    %522 = vmatprep.subr.mxu0 0.0
    %523 = vmatpush1.msra.mxu0 %v222
    %524 = vmatprep.subr.mxu0 0.0
    %525 = vmatpush1.msra.mxu0 %v223
    %526 = vmatprep.subr.mxu0 0.0
    %527 = vmatpush1.msra.mxu0 %v224
    %528 = vmatprep.subr.mxu0 0.0
    %529 = vmatpush1.msra.mxu0 %v225
    %530 = vmatprep.subr.mxu0 0.0
    %531 = vmatpush1.msra.mxu0 %v226
    %532 = vmatprep.subr.mxu0 0.0
    %533 = vmatpush1.msra.mxu0 %v227
    %534 = vmatprep.subr.mxu0 0.0
    %535 = vmatpush1.msra.mxu0 %v228
    %536 = vmatprep.subr.mxu0 0.0
    %537 = vmatpush1.msra.mxu0 %v229
    %538 = vmatprep.subr.mxu0 0.0
    %539 = vmatpush1.msra.mxu0 %v230
    %540 = vmatprep.subr.mxu0 0.0
    %541 = vmatpush1.msra.mxu0 %v231
    %542 = vmatprep.subr.mxu0 0.0
    %543 = vmatpush1.msra.mxu0 %v232
    %544 = vmatprep.subr.mxu0 0.0
    %545 = vmatpush1.msra.mxu0 %v233
    %546 = vmatprep.subr.mxu0 0.0
    %547 = vmatpush1.msra.mxu0 %v234
    %548 = vmatprep.subr.mxu0 0.0
    %549 = vmatpush1.msra.mxu0 %v235
    %550 = vmatprep.subr.mxu0 0.0
    %551 = vmatpush1.msra.mxu0 %v236
    %552 = vmatprep.subr.mxu0 0.0
    %553 = vmatpush1.msra.mxu0 %v237
    %554 = vmatprep.subr.mxu0 0.0
    %555 = vmatpush1.msra.mxu0 %v238
    %556 = vmatprep.subr.mxu0 0.0
    %557 = vmatpush1.msra.mxu0 %v239
    %558 = vmatprep.subr.mxu0 0.0
    %559 = vmatpush1.msra.mxu0 %v240
    %560 = vmatprep.subr.mxu0 0.0
    %561 = vmatpush1.msra.mxu0 %v241
    %562 = vmatprep.subr.mxu0 0.0
    %563 = vmatpush1.msra.mxu0 %v242
    %564 = vmatprep.subr.mxu0 0.0
    %565 = vmatpush1.msra.mxu0 %v243
    %566 = vmatprep.subr.mxu0 0.0
    %567 = vmatpush1.msra.mxu0 %v244
    %568 = vmatprep.subr.mxu0 0.0
    %569 = vmatpush1.msra.mxu0 %v245
    %570 = vmatprep.subr.mxu0 0.0
    %571 = vmatpush1.msra.mxu0 %v246
    %572 = vmatprep.mubr.f32.mxu0 %v289
    %573 = vmatmul.mubr.f32.gmra.mrb[0].mxu0 %v287
    %v574 = vpop.f32.mrb[0].mxu0
    %v575 = vadd.f32 %v505, %v574
    %v576 = vpop.f32.mrb[0].mxu0
    %577 = vdwg.mxu0
    %v578 = vld [vmem:[%s1] sm:$0xff]
    %v579 = vld [vmem:[%s1 + $0x8] sm:$0xff]
    %v582 = vcombine.high %v578, %v578
    %v584 = vunpack.c.l.s4 1983009808
    %v585 = vunpack.c.0.s8 %v584
    %v586 = vlaneseq
    %v587 = vshrl.u32 %v586, 7
    %v588 = vsub.s32 %v585, %v587
    %v589 = vrot.slane %v578, %v588
    %v591 = vunpack.c.l.s4 1983009808
    %v592 = vunpack.c.0.s8 %v591
    %v593 = vlaneseq
    %v594 = vshrl.u32 %v593, 7
    %v595 = vsub.s32 %v592, %v594
    %v596 = vrot.slane %v582, %v595
    %v597 = vcombine.high %v589, %v589
    %v598 = vcombine.high %v596, %v596
    %v599 = vcombine.high %v579, %v579
    %v601 = vunpack.c.l.s4 1983009808
    %v602 = vunpack.c.0.s8 %v601
    %v603 = vlaneseq
    %v604 = vshrl.u32 %v603, 7
    %v605 = vsub.s32 %v602, %v604
    %v606 = vrot.slane %v579, %v605
    %v608 = vunpack.c.l.s4 1983009808
    %v609 = vunpack.c.0.s8 %v608
    %v610 = vlaneseq
    %v611 = vshrl.u32 %v610, 7
    %v612 = vsub.s32 %v609, %v611
    %v613 = vrot.slane %v599, %v612
    %v614 = vcombine.high %v606, %v606
    %v615 = vcombine.high %v613, %v613
    %624 = vmatprep.subr.mxu0 0.0
    %625 = vmatpush1.msra.mxu0 %v119
    %626 = vmatprep.subr.mxu0 0.0
    %627 = vmatpush1.msra.mxu0 %v120
    %628 = vmatprep.subr.mxu0 0.0
    %629 = vmatpush1.msra.mxu0 %v121
    %630 = vmatprep.subr.mxu0 0.0
    %631 = vmatpush1.msra.mxu0 %v122
    %632 = vmatprep.subr.mxu0 0.0
    %633 = vmatpush1.msra.mxu0 %v123
    %634 = vmatprep.subr.mxu0 0.0
    %635 = vmatpush1.msra.mxu0 %v124
    %636 = vmatprep.subr.mxu0 0.0
    %637 = vmatpush1.msra.mxu0 %v125
    %638 = vmatprep.subr.mxu0 0.0
    %639 = vmatpush1.msra.mxu0 %v126
    %640 = vmatprep.subr.mxu0 0.0
    %641 = vmatpush1.msra.mxu0 %v127
    %642 = vmatprep.subr.mxu0 0.0
    %643 = vmatpush1.msra.mxu0 %v128
    %644 = vmatprep.subr.mxu0 0.0
    %645 = vmatpush1.msra.mxu0 %v129
    %646 = vmatprep.subr.mxu0 0.0
    %647 = vmatpush1.msra.mxu0 %v130
    %648 = vmatprep.subr.mxu0 0.0
    %649 = vmatpush1.msra.mxu0 %v131
    %650 = vmatprep.subr.mxu0 0.0
    %651 = vmatpush1.msra.mxu0 %v132
    %652 = vmatprep.subr.mxu0 0.0
    %653 = vmatpush1.msra.mxu0 %v133
    %654 = vmatprep.subr.mxu0 0.0
    %655 = vmatpush1.msra.mxu0 %v134
    %656 = vmatprep.subr.mxu0 0.0
    %657 = vmatpush1.msra.mxu0 %v135
    %658 = vmatprep.subr.mxu0 0.0
    %659 = vmatpush1.msra.mxu0 %v136
    %660 = vmatprep.subr.mxu0 0.0
    %661 = vmatpush1.msra.mxu0 %v137
    %662 = vmatprep.subr.mxu0 0.0
    %663 = vmatpush1.msra.mxu0 %v138
    %664 = vmatprep.subr.mxu0 0.0
    %665 = vmatpush1.msra.mxu0 %v139
    %666 = vmatprep.subr.mxu0 0.0
    %667 = vmatpush1.msra.mxu0 %v140
    %668 = vmatprep.subr.mxu0 0.0
    %669 = vmatpush1.msra.mxu0 %v141
    %670 = vmatprep.subr.mxu0 0.0
    %671 = vmatpush1.msra.mxu0 %v142
    %672 = vmatprep.subr.mxu0 0.0
    %673 = vmatpush1.msra.mxu0 %v143
    %674 = vmatprep.subr.mxu0 0.0
    %675 = vmatpush1.msra.mxu0 %v144
    %676 = vmatprep.subr.mxu0 0.0
    %677 = vmatpush1.msra.mxu0 %v145
    %678 = vmatprep.subr.mxu0 0.0
    %679 = vmatpush1.msra.mxu0 %v146
    %680 = vmatprep.subr.mxu0 0.0
    %681 = vmatpush1.msra.mxu0 %v147
    %682 = vmatprep.subr.mxu0 0.0
    %683 = vmatpush1.msra.mxu0 %v148
    %684 = vmatprep.subr.mxu0 0.0
    %685 = vmatpush1.msra.mxu0 %v149
    %686 = vmatprep.subr.mxu0 0.0
    %687 = vmatpush1.msra.mxu0 %v150
    %688 = vmatprep.mubr.f32.mxu0 %v597
    %689 = vmatmul.mubr.f32.gmra.mrb[0].mxu0 %v589
    %v690 = vpop.f32.mrb[0].mxu0
    %v691 = vadd.f32 %v252, %v690
    %v692 = vpop.f32.mrb[0].mxu0
    %693 = vdwg.mxu0
    %694 = vmatprep.subr.mxu0 0.0
    %695 = vmatpush1.msra.mxu0 %v151
    %696 = vmatprep.subr.mxu0 0.0
    %697 = vmatpush1.msra.mxu0 %v152
    %698 = vmatprep.subr.mxu0 0.0
    %699 = vmatpush1.msra.mxu0 %v153
    %700 = vmatprep.subr.mxu0 0.0
    %701 = vmatpush1.msra.mxu0 %v154
    %702 = vmatprep.subr.mxu0 0.0
    %703 = vmatpush1.msra.mxu0 %v155
    %704 = vmatprep.subr.mxu0 0.0
    %705 = vmatpush1.msra.mxu0 %v156
    %706 = vmatprep.subr.mxu0 0.0
    %707 = vmatpush1.msra.mxu0 %v157
    %708 = vmatprep.subr.mxu0 0.0
    %709 = vmatpush1.msra.mxu0 %v158
    %710 = vmatprep.subr.mxu0 0.0
    %711 = vmatpush1.msra.mxu0 %v159
    %712 = vmatprep.subr.mxu0 0.0
    %713 = vmatpush1.msra.mxu0 %v160
    %714 = vmatprep.subr.mxu0 0.0
    %715 = vmatpush1.msra.mxu0 %v161
    %716 = vmatprep.subr.mxu0 0.0
    %717 = vmatpush1.msra.mxu0 %v162
    %718 = vmatprep.subr.mxu0 0.0
    %719 = vmatpush1.msra.mxu0 %v163
    %720 = vmatprep.subr.mxu0 0.0
    %721 = vmatpush1.msra.mxu0 %v164
    %722 = vmatprep.subr.mxu0 0.0
    %723 = vmatpush1.msra.mxu0 %v165
    %724 = vmatprep.subr.mxu0 0.0
    %725 = vmatpush1.msra.mxu0 %v166
    %726 = vmatprep.subr.mxu0 0.0
    %727 = vmatpush1.msra.mxu0 %v167
    %728 = vmatprep.subr.mxu0 0.0
    %729 = vmatpush1.msra.mxu0 %v168
    %730 = vmatprep.subr.mxu0 0.0
    %731 = vmatpush1.msra.mxu0 %v169
    %732 = vmatprep.subr.mxu0 0.0
    %733 = vmatpush1.msra.mxu0 %v170
    %734 = vmatprep.subr.mxu0 0.0
    %735 = vmatpush1.msra.mxu0 %v171
    %736 = vmatprep.subr.mxu0 0.0
    %737 = vmatpush1.msra.mxu0 %v172
    %738 = vmatprep.subr.mxu0 0.0
    %739 = vmatpush1.msra.mxu0 %v173
    %740 = vmatprep.subr.mxu0 0.0
    %741 = vmatpush1.msra.mxu0 %v174
    %742 = vmatprep.subr.mxu0 0.0
    %743 = vmatpush1.msra.mxu0 %v175
    %744 = vmatprep.subr.mxu0 0.0
    %745 = vmatpush1.msra.mxu0 %v176
    %746 = vmatprep.subr.mxu0 0.0
    %747 = vmatpush1.msra.mxu0 %v177
    %748 = vmatprep.subr.mxu0 0.0
    %749 = vmatpush1.msra.mxu0 %v178
    %750 = vmatprep.subr.mxu0 0.0
    %751 = vmatpush1.msra.mxu0 %v179
    %752 = vmatprep.subr.mxu0 0.0
    %753 = vmatpush1.msra.mxu0 %v180
    %754 = vmatprep.subr.mxu0 0.0
    %755 = vmatpush1.msra.mxu0 %v181
    %756 = vmatprep.subr.mxu0 0.0
    %757 = vmatpush1.msra.mxu0 %v182
    %758 = vmatprep.mubr.f32.mxu0 %v598
    %759 = vmatmul.mubr.f32.gmra.mrb[0].mxu0 %v596
    %v760 = vpop.f32.mrb[0].mxu0
    %v761 = vadd.f32 %v691, %v760
    %v762 = vpop.f32.mrb[0].mxu0
    %763 = vdwg.mxu0
    %764 = vmatprep.subr.mxu0 0.0
    %765 = vmatpush1.msra.mxu0 %v183
    %766 = vmatprep.subr.mxu0 0.0
    %767 = vmatpush1.msra.mxu0 %v184
    %768 = vmatprep.subr.mxu0 0.0
    %769 = vmatpush1.msra.mxu0 %v185
    %770 = vmatprep.subr.mxu0 0.0
    %771 = vmatpush1.msra.mxu0 %v186
    %772 = vmatprep.subr.mxu0 0.0
    %773 = vmatpush1.msra.mxu0 %v187
    %774 = vmatprep.subr.mxu0 0.0
    %775 = vmatpush1.msra.mxu0 %v188
    %776 = vmatprep.subr.mxu0 0.0
    %777 = vmatpush1.msra.mxu0 %v189
    %778 = vmatprep.subr.mxu0 0.0
    %779 = vmatpush1.msra.mxu0 %v190
    %780 = vmatprep.subr.mxu0 0.0
    %781 = vmatpush1.msra.mxu0 %v191
    %782 = vmatprep.subr.mxu0 0.0
    %783 = vmatpush1.msra.mxu0 %v192
    %784 = vmatprep.subr.mxu0 0.0
    %785 = vmatpush1.msra.mxu0 %v193
    %786 = vmatprep.subr.mxu0 0.0
    %787 = vmatpush1.msra.mxu0 %v194
    %788 = vmatprep.subr.mxu0 0.0
    %789 = vmatpush1.msra.mxu0 %v195
    %790 = vmatprep.subr.mxu0 0.0
    %791 = vmatpush1.msra.mxu0 %v196
    %792 = vmatprep.subr.mxu0 0.0
    %793 = vmatpush1.msra.mxu0 %v197
    %794 = vmatprep.subr.mxu0 0.0
    %795 = vmatpush1.msra.mxu0 %v198
    %796 = vmatprep.subr.mxu0 0.0
    %797 = vmatpush1.msra.mxu0 %v199
    %798 = vmatprep.subr.mxu0 0.0
    %799 = vmatpush1.msra.mxu0 %v200
    %800 = vmatprep.subr.mxu0 0.0
    %801 = vmatpush1.msra.mxu0 %v201
    %802 = vmatprep.subr.mxu0 0.0
    %803 = vmatpush1.msra.mxu0 %v202
    %804 = vmatprep.subr.mxu0 0.0
    %805 = vmatpush1.msra.mxu0 %v203
    %806 = vmatprep.subr.mxu0 0.0
    %807 = vmatpush1.msra.mxu0 %v204
    %808 = vmatprep.subr.mxu0 0.0
    %809 = vmatpush1.msra.mxu0 %v205
    %810 = vmatprep.subr.mxu0 0.0
    %811 = vmatpush1.msra.mxu0 %v206
    %812 = vmatprep.subr.mxu0 0.0
    %813 = vmatpush1.msra.mxu0 %v207
    %814 = vmatprep.subr.mxu0 0.0
    %815 = vmatpush1.msra.mxu0 %v208
    %816 = vmatprep.subr.mxu0 0.0
    %817 = vmatpush1.msra.mxu0 %v209
    %818 = vmatprep.subr.mxu0 0.0
    %819 = vmatpush1.msra.mxu0 %v210
    %820 = vmatprep.subr.mxu0 0.0
    %821 = vmatpush1.msra.mxu0 %v211
    %822 = vmatprep.subr.mxu0 0.0
    %823 = vmatpush1.msra.mxu0 %v212
    %824 = vmatprep.subr.mxu0 0.0
    %825 = vmatpush1.msra.mxu0 %v213
    %826 = vmatprep.subr.mxu0 0.0
    %827 = vmatpush1.msra.mxu0 %v214
    %828 = vmatprep.mubr.f32.mxu0 %v614
    %829 = vmatmul.mubr.f32.gmra.mrb[0].mxu0 %v606
    %v830 = vpop.f32.mrb[0].mxu0
    %v831 = vadd.f32 %v761, %v830
    %v832 = vpop.f32.mrb[0].mxu0
    %833 = vdwg.mxu0
    %834 = vmatprep.subr.mxu0 0.0
    %835 = vmatpush1.msra.mxu0 %v215
    %836 = vmatprep.subr.mxu0 0.0
    %837 = vmatpush1.msra.mxu0 %v216
    %838 = vmatprep.subr.mxu0 0.0
    %839 = vmatpush1.msra.mxu0 %v217
    %840 = vmatprep.subr.mxu0 0.0
    %841 = vmatpush1.msra.mxu0 %v218
    %842 = vmatprep.subr.mxu0 0.0
    %843 = vmatpush1.msra.mxu0 %v219
    %844 = vmatprep.subr.mxu0 0.0
    %845 = vmatpush1.msra.mxu0 %v220
    %846 = vmatprep.subr.mxu0 0.0
    %847 = vmatpush1.msra.mxu0 %v221
    %848 = vmatprep.subr.mxu0 0.0
    %849 = vmatpush1.msra.mxu0 %v222
    %850 = vmatprep.subr.mxu0 0.0
    %851 = vmatpush1.msra.mxu0 %v223
    %852 = vmatprep.subr.mxu0 0.0
    %853 = vmatpush1.msra.mxu0 %v224
    %854 = vmatprep.subr.mxu0 0.0
    %855 = vmatpush1.msra.mxu0 %v225
    %856 = vmatprep.subr.mxu0 0.0
    %857 = vmatpush1.msra.mxu0 %v226
    %858 = vmatprep.subr.mxu0 0.0
    %859 = vmatpush1.msra.mxu0 %v227
    %860 = vmatprep.subr.mxu0 0.0
    %861 = vmatpush1.msra.mxu0 %v228
    %862 = vmatprep.subr.mxu0 0.0
    %863 = vmatpush1.msra.mxu0 %v229
    %864 = vmatprep.subr.mxu0 0.0
    %865 = vmatpush1.msra.mxu0 %v230
    %866 = vmatprep.subr.mxu0 0.0
    %867 = vmatpush1.msra.mxu0 %v231
    %868 = vmatprep.subr.mxu0 0.0
    %869 = vmatpush1.msra.mxu0 %v232
    %870 = vmatprep.subr.mxu0 0.0
    %871 = vmatpush1.msra.mxu0 %v233
    %872 = vmatprep.subr.mxu0 0.0
    %873 = vmatpush1.msra.mxu0 %v234
    %874 = vmatprep.subr.mxu0 0.0
    %875 = vmatpush1.msra.mxu0 %v235
    %876 = vmatprep.subr.mxu0 0.0
    %877 = vmatpush1.msra.mxu0 %v236
    %878 = vmatprep.subr.mxu0 0.0
    %879 = vmatpush1.msra.mxu0 %v237
    %880 = vmatprep.subr.mxu0 0.0
    %881 = vmatpush1.msra.mxu0 %v238
    %882 = vmatprep.subr.mxu0 0.0
    %883 = vmatpush1.msra.mxu0 %v239
    %884 = vmatprep.subr.mxu0 0.0
    %885 = vmatpush1.msra.mxu0 %v240
    %886 = vmatprep.subr.mxu0 0.0
    %887 = vmatpush1.msra.mxu0 %v241
    %888 = vmatprep.subr.mxu0 0.0
    %889 = vmatpush1.msra.mxu0 %v242
    %890 = vmatprep.subr.mxu0 0.0
    %891 = vmatpush1.msra.mxu0 %v243
    %892 = vmatprep.subr.mxu0 0.0
    %893 = vmatpush1.msra.mxu0 %v244
    %894 = vmatprep.subr.mxu0 0.0
    %895 = vmatpush1.msra.mxu0 %v245
    %896 = vmatprep.subr.mxu0 0.0
    %897 = vmatpush1.msra.mxu0 %v246
    %898 = vmatprep.mubr.f32.mxu0 %v615
    %899 = vmatmul.mubr.f32.gmra.mrb[0].mxu0 %v613
    %v900 = vpop.f32.mrb[0].mxu0
    %v901 = vadd.f32 %v831, %v900
    %v902 = vpop.f32.mrb[0].mxu0
    %903 = vdwg.mxu0
    %v904 = vld [vmem:[%s5] sm:$0xff]
    %v905 = vld [vmem:[%s5 + $0x8] sm:$0xff]
    %v906 = vld [vmem:[%s5 + $0x10] sm:$0xff]
    %v907 = vld [vmem:[%s5 + $0x18] sm:$0xff]
    %v908 = vld [vmem:[%s5 + $0x20] sm:$0xff]
    %v909 = vld [vmem:[%s5 + $0x28] sm:$0xff]
    %v910 = vld [vmem:[%s5 + $0x30] sm:$0xff]
    %v911 = vld [vmem:[%s5 + $0x38] sm:$0xff]
    %v912 = vld [vmem:[%s5 + $0x40] sm:$0xff]
    %v913 = vld [vmem:[%s5 + $0x48] sm:$0xff]
    %v914 = vld [vmem:[%s5 + $0x50] sm:$0xff]
    %v915 = vld [vmem:[%s5 + $0x58] sm:$0xff]
    %v916 = vld [vmem:[%s5 + $0x60] sm:$0xff]
    %v917 = vld [vmem:[%s5 + $0x68] sm:$0xff]
    %v918 = vld [vmem:[%s5 + $0x70] sm:$0xff]
    %v919 = vld [vmem:[%s5 + $0x78] sm:$0xff]
    %v920 = vld [vmem:[%s6] sm:$0xff]
    %v921 = vld [vmem:[%s6 + $0x8] sm:$0xff]
    %v922 = vld [vmem:[%s6 + $0x10] sm:$0xff]
    %v923 = vld [vmem:[%s6 + $0x18] sm:$0xff]
    %v924 = vld [vmem:[%s6 + $0x20] sm:$0xff]
    %v925 = vld [vmem:[%s6 + $0x28] sm:$0xff]
    %v926 = vld [vmem:[%s6 + $0x30] sm:$0xff]
    %v927 = vld [vmem:[%s6 + $0x38] sm:$0xff]
    %v928 = vld [vmem:[%s6 + $0x40] sm:$0xff]
    %v929 = vld [vmem:[%s6 + $0x48] sm:$0xff]
    %v930 = vld [vmem:[%s6 + $0x50] sm:$0xff]
    %v931 = vld [vmem:[%s6 + $0x58] sm:$0xff]
    %v932 = vld [vmem:[%s6 + $0x60] sm:$0xff]
    %v933 = vld [vmem:[%s6 + $0x68] sm:$0xff]
    %v934 = vld [vmem:[%s6 + $0x70] sm:$0xff]
    %v935 = vld [vmem:[%s6 + $0x78] sm:$0xff]
    %936 = vmatprep.subr.mxu0 0.0
    %937 = vmatpush1.msra.mxu0 %v920
    %938 = vmatprep.subr.mxu0 0.0
    %939 = vmatpush1.msra.mxu0 %v921
    %940 = vmatprep.subr.mxu0 0.0
    %941 = vmatpush1.msra.mxu0 %v922
    %942 = vmatprep.subr.mxu0 0.0
    %943 = vmatpush1.msra.mxu0 %v923
    %944 = vmatprep.subr.mxu0 0.0
    %945 = vmatpush1.msra.mxu0 %v924
    %946 = vmatprep.subr.mxu0 0.0
    %947 = vmatpush1.msra.mxu0 %v925
    %948 = vmatprep.subr.mxu0 0.0
    %949 = vmatpush1.msra.mxu0 %v926
    %950 = vmatprep.subr.mxu0 0.0
    %951 = vmatpush1.msra.mxu0 %v927
    %952 = vmatprep.subr.mxu0 0.0
    %953 = vmatpush1.msra.mxu0 %v928
    %954 = vmatprep.subr.mxu0 0.0
    %955 = vmatpush1.msra.mxu0 %v929
    %956 = vmatprep.subr.mxu0 0.0
    %957 = vmatpush1.msra.mxu0 %v930
    %958 = vmatprep.subr.mxu0 0.0
    %959 = vmatpush1.msra.mxu0 %v931
    %960 = vmatprep.subr.mxu0 0.0
    %961 = vmatpush1.msra.mxu0 %v932
    %962 = vmatprep.subr.mxu0 0.0
    %963 = vmatpush1.msra.mxu0 %v933
    %964 = vmatprep.subr.mxu0 0.0
    %965 = vmatpush1.msra.mxu0 %v934
    %966 = vmatprep.subr.mxu0 0.0
    %967 = vmatpush1.msra.mxu0 %v935
    %968 = vmatprep.subr.mxu0 0.0
    %969 = vmatpush1.msra.mxu0 0.0
    %970 = vmatprep.subr.mxu0 0.0
    %971 = vmatpush1.msra.mxu0 0.0
    %972 = vmatprep.subr.mxu0 0.0
    %973 = vmatpush1.msra.mxu0 0.0
    %974 = vmatprep.subr.mxu0 0.0
    %975 = vmatpush1.msra.mxu0 0.0
    %976 = vmatprep.subr.mxu0 0.0
    %977 = vmatpush1.msra.mxu0 0.0
    %978 = vmatprep.subr.mxu0 0.0
    %979 = vmatpush1.msra.mxu0 0.0
    %980 = vmatprep.subr.mxu0 0.0
    %981 = vmatpush1.msra.mxu0 0.0
    %982 = vmatprep.subr.mxu0 0.0
    %983 = vmatpush1.msra.mxu0 0.0
    %984 = vmatprep.subr.mxu0 0.0
    %985 = vmatpush1.msra.mxu0 0.0
    %986 = vmatprep.subr.mxu0 0.0
    %987 = vmatpush1.msra.mxu0 0.0
    %988 = vmatprep.subr.mxu0 0.0
    %989 = vmatpush1.msra.mxu0 0.0
    %990 = vmatprep.subr.mxu0 0.0
    %991 = vmatpush1.msra.mxu0 0.0
    %992 = vmatprep.subr.mxu0 0.0
    %993 = vmatpush1.msra.mxu0 0.0
    %994 = vmatprep.subr.mxu0 0.0
    %995 = vmatpush1.msra.mxu0 0.0
    %996 = vmatprep.subr.mxu0 0.0
    %997 = vmatpush1.msra.mxu0 0.0
    %998 = vmatprep.subr.mxu0 0.0
    %999 = vmatpush1.msra.mxu0 0.0
    %1000 = vmatprep.mubr.f32.mxu0 0.0
    %1001 = vmatmul.mubr.f32.gmra.mrb[0].mxu0 %v901
    %v1002 = vpop.f32.mrb[0].mxu0
    %v1003 = vadd.f32 0.0, %v1002
    %v1004 = vpop.f32.mrb[0].mxu0
    %1005 = vdwg.mxu0
    %1006 = vmatprep.subr.mxu0 0.0
    %1007 = vmatpush1.msra.mxu0 %v904
    %1008 = vmatprep.subr.mxu0 0.0
    %1009 = vmatpush1.msra.mxu0 %v905
    %1010 = vmatprep.subr.mxu0 0.0
    %1011 = vmatpush1.msra.mxu0 %v906
    %1012 = vmatprep.subr.mxu0 0.0
    %1013 = vmatpush1.msra.mxu0 %v907
    %1014 = vmatprep.subr.mxu0 0.0
    %1015 = vmatpush1.msra.mxu0 %v908
    %1016 = vmatprep.subr.mxu0 0.0
    %1017 = vmatpush1.msra.mxu0 %v909
    %1018 = vmatprep.subr.mxu0 0.0
    %1019 = vmatpush1.msra.mxu0 %v910
    %1020 = vmatprep.subr.mxu0 0.0
    %1021 = vmatpush1.msra.mxu0 %v911
    %1022 = vmatprep.subr.mxu0 0.0
    %1023 = vmatpush1.msra.mxu0 %v912
    %1024 = vmatprep.subr.mxu0 0.0
    %1025 = vmatpush1.msra.mxu0 %v913
    %1026 = vmatprep.subr.mxu0 0.0
    %1027 = vmatpush1.msra.mxu0 %v914
    %1028 = vmatprep.subr.mxu0 0.0
    %1029 = vmatpush1.msra.mxu0 %v915
    %1030 = vmatprep.subr.mxu0 0.0
    %1031 = vmatpush1.msra.mxu0 %v916
    %1032 = vmatprep.subr.mxu0 0.0
    %1033 = vmatpush1.msra.mxu0 %v917
    %1034 = vmatprep.subr.mxu0 0.0
    %1035 = vmatpush1.msra.mxu0 %v918
    %1036 = vmatprep.subr.mxu0 0.0
    %1037 = vmatpush1.msra.mxu0 %v919
    %1038 = vmatprep.subr.mxu0 0.0
    %1039 = vmatpush1.msra.mxu0 0.0
    %1040 = vmatprep.subr.mxu0 0.0
    %1041 = vmatpush1.msra.mxu0 0.0
    %1042 = vmatprep.subr.mxu0 0.0
    %1043 = vmatpush1.msra.mxu0 0.0
    %1044 = vmatprep.subr.mxu0 0.0
    %1045 = vmatpush1.msra.mxu0 0.0
    %1046 = vmatprep.subr.mxu0 0.0
    %1047 = vmatpush1.msra.mxu0 0.0
    %1048 = vmatprep.subr.mxu0 0.0
    %1049 = vmatpush1.msra.mxu0 0.0
    %1050 = vmatprep.subr.mxu0 0.0
    %1051 = vmatpush1.msra.mxu0 0.0
    %1052 = vmatprep.subr.mxu0 0.0
    %1053 = vmatpush1.msra.mxu0 0.0
    %1054 = vmatprep.subr.mxu0 0.0
    %1055 = vmatpush1.msra.mxu0 0.0
    %1056 = vmatprep.subr.mxu0 0.0
    %1057 = vmatpush1.msra.mxu0 0.0
    %1058 = vmatprep.subr.mxu0 0.0
    %1059 = vmatpush1.msra.mxu0 0.0
    %1060 = vmatprep.subr.mxu0 0.0
    %1061 = vmatpush1.msra.mxu0 0.0
    %1062 = vmatprep.subr.mxu0 0.0
    %1063 = vmatpush1.msra.mxu0 0.0
    %1064 = vmatprep.subr.mxu0 0.0
    %1065 = vmatpush1.msra.mxu0 0.0
    %1066 = vmatprep.subr.mxu0 0.0
    %1067 = vmatpush1.msra.mxu0 0.0
    %1068 = vmatprep.subr.mxu0 0.0
    %1069 = vmatpush1.msra.mxu0 0.0
    %1070 = vmatprep.mubr.f32.mxu0 0.0
    %1071 = vmatmul.mubr.f32.gmra.mrb[0].mxu0 %v575
    %v1072 = vpop.f32.mrb[0].mxu0
    %v1073 = vadd.f32 %v1003, %v1072
    %v1074 = vpop.f32.mrb[0].mxu0
    %1075 = vdwg.mxu0
    %v1076 = vld [vmem:[%s7] sm:$0x1]
    %v1078 = vlaneseq
    %v1079 = vshrl.u32 %v1078, 7
    %v1080 = vsub.s32 0, %v1079
    %v1081 = vrot.slane %v1076, %v1080
    %v1083 = vadd.f32 %v1073, %v1081
    %v1084 = vmax.f32 %v1083, 0.0
    %v1085 = vld [vmem:[%s8] sm:$0xff]
    %v1086 = vld [vmem:[%s8 + $0x8] sm:$0xff]
    %v1087 = vld [vmem:[%s8 + $0x10] sm:$0xff]
    %v1088 = vld [vmem:[%s8 + $0x18] sm:$0xff]
    %v1089 = vld [vmem:[%s8 + $0x20] sm:$0xff]
    %v1090 = vld [vmem:[%s8 + $0x28] sm:$0xff]
    %v1091 = vld [vmem:[%s8 + $0x30] sm:$0xff]
    %v1092 = vld [vmem:[%s8 + $0x38] sm:$0xff]
    %v1093 = vld [vmem:[%s8 + $0x40] sm:$0xff]
    %v1094 = vld [vmem:[%s8 + $0x48] sm:$0xff]
    %v1095 = vld [vmem:[%s8 + $0x50] sm:$0xff]
    %v1096 = vld [vmem:[%s8 + $0x58] sm:$0xff]
    %v1097 = vld [vmem:[%s8 + $0x60] sm:$0xff]
    %v1098 = vld [vmem:[%s8 + $0x68] sm:$0xff]
    %v1099 = vld [vmem:[%s8 + $0x70] sm:$0xff]
    %v1100 = vld [vmem:[%s8 + $0x78] sm:$0xff]
    %v1101 = vld [vmem:[%s9] sm:$0x1]
    %v1103 = vlaneseq
    %v1104 = vshrl.u32 %v1103, 7
    %v1105 = vsub.s32 0, %v1104
    %v1106 = vrot.slane %v1101, %v1105
    %1108 = vmatprep.subr.mxu0 0.0
    %1109 = vmatpush1.msra.mxu0 %v1085
    %1110 = vmatprep.subr.mxu0 0.0
    %1111 = vmatpush1.msra.mxu0 %v1086
    %1112 = vmatprep.subr.mxu0 0.0
    %1113 = vmatpush1.msra.mxu0 %v1087
    %1114 = vmatprep.subr.mxu0 0.0
    %1115 = vmatpush1.msra.mxu0 %v1088
    %1116 = vmatprep.subr.mxu0 0.0
    %1117 = vmatpush1.msra.mxu0 %v1089
    %1118 = vmatprep.subr.mxu0 0.0
    %1119 = vmatpush1.msra.mxu0 %v1090
    %1120 = vmatprep.subr.mxu0 0.0
    %1121 = vmatpush1.msra.mxu0 %v1091
    %1122 = vmatprep.subr.mxu0 0.0
    %1123 = vmatpush1.msra.mxu0 %v1092
    %1124 = vmatprep.subr.mxu0 0.0
    %1125 = vmatpush1.msra.mxu0 %v1093
    %1126 = vmatprep.subr.mxu0 0.0
    %1127 = vmatpush1.msra.mxu0 %v1094
    %1128 = vmatprep.subr.mxu0 0.0
    %1129 = vmatpush1.msra.mxu0 %v1095
    %1130 = vmatprep.subr.mxu0 0.0
    %1131 = vmatpush1.msra.mxu0 %v1096
    %1132 = vmatprep.subr.mxu0 0.0
    %1133 = vmatpush1.msra.mxu0 %v1097
    %1134 = vmatprep.subr.mxu0 0.0
    %1135 = vmatpush1.msra.mxu0 %v1098
    %1136 = vmatprep.subr.mxu0 0.0
    %1137 = vmatpush1.msra.mxu0 %v1099
    %1138 = vmatprep.subr.mxu0 0.0
    %1139 = vmatpush1.msra.mxu0 %v1100
    %1140 = vmatprep.subr.mxu0 0.0
    %1141 = vmatpush1.msra.mxu0 0.0
    %1142 = vmatprep.subr.mxu0 0.0
    %1143 = vmatpush1.msra.mxu0 0.0
    %1144 = vmatprep.subr.mxu0 0.0
    %1145 = vmatpush1.msra.mxu0 0.0
    %1146 = vmatprep.subr.mxu0 0.0
    %1147 = vmatpush1.msra.mxu0 0.0
    %1148 = vmatprep.subr.mxu0 0.0
    %1149 = vmatpush1.msra.mxu0 0.0
    %1150 = vmatprep.subr.mxu0 0.0
    %1151 = vmatpush1.msra.mxu0 0.0
    %1152 = vmatprep.subr.mxu0 0.0
    %1153 = vmatpush1.msra.mxu0 0.0
    %1154 = vmatprep.subr.mxu0 0.0
    %1155 = vmatpush1.msra.mxu0 0.0
    %1156 = vmatprep.subr.mxu0 0.0
    %1157 = vmatpush1.msra.mxu0 0.0
    %1158 = vmatprep.subr.mxu0 0.0
    %1159 = vmatpush1.msra.mxu0 0.0
    %1160 = vmatprep.subr.mxu0 0.0
    %1161 = vmatpush1.msra.mxu0 0.0
    %1162 = vmatprep.subr.mxu0 0.0
    %1163 = vmatpush1.msra.mxu0 0.0
    %1164 = vmatprep.subr.mxu0 0.0
    %1165 = vmatpush1.msra.mxu0 0.0
    %1166 = vmatprep.subr.mxu0 0.0
    %1167 = vmatpush1.msra.mxu0 0.0
    %1168 = vmatprep.subr.mxu0 0.0
    %1169 = vmatpush1.msra.mxu0 0.0
    %1170 = vmatprep.subr.mxu0 0.0
    %1171 = vmatpush1.msra.mxu0 0.0
    %1172 = vmatprep.mubr.f32.mxu0 0.0
    %1173 = vmatmul.mubr.f32.gmra.mrb[0].mxu0 %v1084
    %v1174 = vpop.f32.mrb[0].mxu0
    %v1175 = vadd.f32 %v1106, %v1174
    %v1176 = vpop.f32.mrb[0].mxu0
    %1177 = vdwg.mxu0
    %v1178 = vld [vmem:[%s2] sm:$0x3]
    %v1179 = vmul.f32 %v1175, 0.5
    %v1180 = vmul.f32 %v1179, 1.442695
    %v1181 = vpow.pop %v1180
    %1183 = vrot.lane.b32.xlu0 %v1181, 64
    %v1184 = vpop.permute.xlu0 %1183
    %v1186 = vmul.f32 %v1178, %v1184
    %v1187 = vadd.f32 %v1175, %v1186
    %v1188 = vld [vmem:[#allocation5] sm:$0xff]
    %v1189 = vld [vmem:[#allocation5 + $0x8] sm:$0xff]
    %v1190 = vld [vmem:[#allocation5 + $0x10] sm:$0xff]
    %v1191 = vld [vmem:[#allocation5 + $0x18] sm:$0xff]
    %v1192 = vld [vmem:[#allocation5 + $0x20] sm:$0xff]
    %v1193 = vld [vmem:[#allocation5 + $0x28] sm:$0xff]
    %v1194 = vld [vmem:[#allocation5 + $0x30] sm:$0xff]
    %v1195 = vld [vmem:[#allocation5 + $0x38] sm:$0xff]
    %v1196 = vld [vmem:[%s11] sm:$0xff]
    %v1197 = vld [vmem:[%s11 + $0x8] sm:$0xff]
    %v1198 = vld [vmem:[%s11 + $0x10] sm:$0xff]
    %v1199 = vld [vmem:[%s11 + $0x18] sm:$0xff]
    %v1200 = vld [vmem:[%s11 + $0x20] sm:$0xff]
    %v1201 = vld [vmem:[%s11 + $0x28] sm:$0xff]
    %v1202 = vld [vmem:[%s11 + $0x30] sm:$0xff]
    %v1203 = vld [vmem:[%s11 + $0x38] sm:$0xff]
    %v1204 = vld [vmem:[%s11 + $0x40] sm:$0xff]
    %v1205 = vld [vmem:[%s11 + $0x48] sm:$0xff]
    %v1206 = vld [vmem:[%s11 + $0x50] sm:$0xff]
    %v1207 = vld [vmem:[%s11 + $0x58] sm:$0xff]
    %v1208 = vld [vmem:[%s11 + $0x60] sm:$0xff]
    %v1209 = vld [vmem:[%s11 + $0x68] sm:$0xff]
    %v1210 = vld [vmem:[%s11 + $0x70] sm:$0xff]
    %v1211 = vld [vmem:[%s11 + $0x78] sm:$0xff]
    %1212 = vmatprep.subr.mxu0 0.0
    %1213 = vmatpush1.msra.mxu0 %v1196
    %1214 = vmatprep.subr.mxu0 0.0
    %1215 = vmatpush1.msra.mxu0 %v1197
    %1216 = vmatprep.subr.mxu0 0.0
    %1217 = vmatpush1.msra.mxu0 %v1198
    %1218 = vmatprep.subr.mxu0 0.0
    %1219 = vmatpush1.msra.mxu0 %v1199
    %1220 = vmatprep.subr.mxu0 0.0
    %1221 = vmatpush1.msra.mxu0 %v1200
    %1222 = vmatprep.subr.mxu0 0.0
    %1223 = vmatpush1.msra.mxu0 %v1201
    %1224 = vmatprep.subr.mxu0 0.0
    %1225 = vmatpush1.msra.mxu0 %v1202
    %1226 = vmatprep.subr.mxu0 0.0
    %1227 = vmatpush1.msra.mxu0 %v1203
    %1228 = vmatprep.subr.mxu0 0.0
    %1229 = vmatpush1.msra.mxu0 %v1204
    %1230 = vmatprep.subr.mxu0 0.0
    %1231 = vmatpush1.msra.mxu0 %v1205
    %1232 = vmatprep.subr.mxu0 0.0
    %1233 = vmatpush1.msra.mxu0 %v1206
    %1234 = vmatprep.subr.mxu0 0.0
    %1235 = vmatpush1.msra.mxu0 %v1207
    %1236 = vmatprep.subr.mxu0 0.0
    %1237 = vmatpush1.msra.mxu0 %v1208
    %1238 = vmatprep.subr.mxu0 0.0
    %1239 = vmatpush1.msra.mxu0 %v1209
    %1240 = vmatprep.subr.mxu0 0.0
    %1241 = vmatpush1.msra.mxu0 %v1210
    %1242 = vmatprep.subr.mxu0 0.0
    %1243 = vmatpush1.msra.mxu0 %v1211
    %1244 = vmatprep.subr.mxu0 0.0
    %1245 = vmatpush1.msra.mxu0 0.0
    %1246 = vmatprep.subr.mxu0 0.0
    %1247 = vmatpush1.msra.mxu0 0.0
    %1248 = vmatprep.subr.mxu0 0.0
    %1249 = vmatpush1.msra.mxu0 0.0
    %1250 = vmatprep.subr.mxu0 0.0
    %1251 = vmatpush1.msra.mxu0 0.0
    %1252 = vmatprep.subr.mxu0 0.0
    %1253 = vmatpush1.msra.mxu0 0.0
    %1254 = vmatprep.subr.mxu0 0.0
    %1255 = vmatpush1.msra.mxu0 0.0
    %1256 = vmatprep.subr.mxu0 0.0
    %1257 = vmatpush1.msra.mxu0 0.0
    %1258 = vmatprep.subr.mxu0 0.0
    %1259 = vmatpush1.msra.mxu0 0.0
    %1260 = vmatprep.subr.mxu0 0.0
    %1261 = vmatpush1.msra.mxu0 0.0
    %1262 = vmatprep.subr.mxu0 0.0
    %1263 = vmatpush1.msra.mxu0 0.0
    %1264 = vmatprep.subr.mxu0 0.0
    %1265 = vmatpush1.msra.mxu0 0.0
    %1266 = vmatprep.subr.mxu0 0.0
    %1267 = vmatpush1.msra.mxu0 0.0
    %1268 = vmatprep.subr.mxu0 0.0
    %1269 = vmatpush1.msra.mxu0 0.0
    %1270 = vmatprep.subr.mxu0 0.0
    %1271 = vmatpush1.msra.mxu0 0.0
    %1272 = vmatprep.subr.mxu0 0.0
    %1273 = vmatpush1.msra.mxu0 0.0
    %1274 = vmatprep.subr.mxu0 0.0
    %1275 = vmatpush1.msra.mxu0 0.0
    %1276 = vmatprep.mubr.f32.mxu0 0.0
    %1277 = vmatmul.mubr.f32.gmra.mrb[0].mxu0 %v575
    %v1278 = vpop.f32.mrb[0].mxu0
    %v1279 = vadd.f32 0.0, %v1278
    %v1280 = vpop.f32.mrb[0].mxu0
    %1281 = vdwg.mxu0
    %vm1282 = vcmask 523264
    %v1284 = vsel %vm1282, %v1187, 0
    %1286 = vmatprep.subr.mxu0 0.0
    %1287 = vmatpush1.msra.mxu0 %v1188
    %1288 = vmatprep.subr.mxu0 0.0
    %1289 = vmatpush1.msra.mxu0 %v1189
    %1290 = vmatprep.subr.mxu0 0.0
    %1291 = vmatpush1.msra.mxu0 %v1190
    %1292 = vmatprep.subr.mxu0 0.0
    %1293 = vmatpush1.msra.mxu0 %v1191
    %1294 = vmatprep.subr.mxu0 0.0
    %1295 = vmatpush1.msra.mxu0 %v1192
    %1296 = vmatprep.subr.mxu0 0.0
    %1297 = vmatpush1.msra.mxu0 %v1193
    %1298 = vmatprep.subr.mxu0 0.0
    %1299 = vmatpush1.msra.mxu0 %v1194
    %1300 = vmatprep.subr.mxu0 0.0
    %1301 = vmatpush1.msra.mxu0 %v1195
    %1302 = vmatprep.subr.mxu0 0.0
    %1303 = vmatpush1.msra.mxu0 0.0
    %1304 = vmatprep.subr.mxu0 0.0
    %1305 = vmatpush1.msra.mxu0 0.0
    %1306 = vmatprep.subr.mxu0 0.0
    %1307 = vmatpush1.msra.mxu0 0.0
    %1308 = vmatprep.subr.mxu0 0.0
    %1309 = vmatpush1.msra.mxu0 0.0
    %1310 = vmatprep.subr.mxu0 0.0
    %1311 = vmatpush1.msra.mxu0 0.0
    %1312 = vmatprep.subr.mxu0 0.0
    %1313 = vmatpush1.msra.mxu0 0.0
    %1314 = vmatprep.subr.mxu0 0.0
    %1315 = vmatpush1.msra.mxu0 0.0
    %1316 = vmatprep.subr.mxu0 0.0
    %1317 = vmatpush1.msra.mxu0 0.0
    %1318 = vmatprep.subr.mxu0 0.0
    %1319 = vmatpush1.msra.mxu0 0.0
    %1320 = vmatprep.subr.mxu0 0.0
    %1321 = vmatpush1.msra.mxu0 0.0
    %1322 = vmatprep.subr.mxu0 0.0
    %1323 = vmatpush1.msra.mxu0 0.0
    %1324 = vmatprep.subr.mxu0 0.0
    %1325 = vmatpush1.msra.mxu0 0.0
    %1326 = vmatprep.subr.mxu0 0.0
    %1327 = vmatpush1.msra.mxu0 0.0
    %1328 = vmatprep.subr.mxu0 0.0
    %1329 = vmatpush1.msra.mxu0 0.0
    %1330 = vmatprep.subr.mxu0 0.0
    %1331 = vmatpush1.msra.mxu0 0.0
    %1332 = vmatprep.subr.mxu0 0.0
    %1333 = vmatpush1.msra.mxu0 0.0
    %1334 = vmatprep.subr.mxu0 0.0
    %1335 = vmatpush1.msra.mxu0 0.0
    %1336 = vmatprep.subr.mxu0 0.0
    %1337 = vmatpush1.msra.mxu0 0.0
    %1338 = vmatprep.subr.mxu0 0.0
    %1339 = vmatpush1.msra.mxu0 0.0
    %1340 = vmatprep.subr.mxu0 0.0
    %1341 = vmatpush1.msra.mxu0 0.0
    %1342 = vmatprep.subr.mxu0 0.0
    %1343 = vmatpush1.msra.mxu0 0.0
    %1344 = vmatprep.subr.mxu0 0.0
    %1345 = vmatpush1.msra.mxu0 0.0
    %1346 = vmatprep.subr.mxu0 0.0
    %1347 = vmatpush1.msra.mxu0 0.0
    %1348 = vmatprep.subr.mxu0 0.0
    %1349 = vmatpush1.msra.mxu0 0.0
    %1350 = vmatprep.mubr.f32.mxu0 0.0
    %1351 = vmatmul.mubr.f32.gmra.mrb[0].mxu0 %v1284
    %v1352 = vpop.f32.mrb[0].mxu0
    %v1353 = vadd.f32 %v1279, %v1352
    %v1354 = vpop.f32.mrb[0].mxu0
    %1355 = vdwg.mxu0
    %v1356 = vld [vmem:[%s12] sm:$0x1]
    %v1358 = vlaneseq
    %v1359 = vshrl.u32 %v1358, 7
    %v1360 = vsub.s32 0, %v1359
    %v1361 = vrot.slane %v1356, %v1360
    %v1363 = vadd.f32 %v1353, %v1361
    %v1364 = vld [vmem:[#allocation7] sm:$0xff]
    %v1365 = vld [vmem:[#allocation7 + $0x8] sm:$0xff]
    %v1366 = vld [vmem:[#allocation7 + $0x10] sm:$0xff]
    %v1367 = vld [vmem:[#allocation7 + $0x18] sm:$0xff]
    %v1368 = vld [vmem:[#allocation7 + $0x20] sm:$0xff]
    %v1369 = vld [vmem:[#allocation7 + $0x28] sm:$0xff]
    %v1370 = vld [vmem:[#allocation7 + $0x30] sm:$0xff]
    %v1371 = vld [vmem:[#allocation7 + $0x38] sm:$0xff]
    %v1372 = vld [vmem:[%s14] sm:$0x1]
    %v1374 = vlaneseq
    %v1375 = vshrl.u32 %v1374, 7
    %v1376 = vsub.s32 0, %v1375
    %v1377 = vrot.slane %v1372, %v1376
    %v1380 = vsel %vm1282, %v1363, 0
    %1382 = vmatprep.subr.mxu0 0.0
    %1383 = vmatpush1.msra.mxu0 %v1364
    %1384 = vmatprep.subr.mxu0 0.0
    %1385 = vmatpush1.msra.mxu0 %v1365
    %1386 = vmatprep.subr.mxu0 0.0
    %1387 = vmatpush1.msra.mxu0 %v1366
    %1388 = vmatprep.subr.mxu0 0.0
    %1389 = vmatpush1.msra.mxu0 %v1367
    %1390 = vmatprep.subr.mxu0 0.0
    %1391 = vmatpush1.msra.mxu0 %v1368
    %1392 = vmatprep.subr.mxu0 0.0
    %1393 = vmatpush1.msra.mxu0 %v1369
    %1394 = vmatprep.subr.mxu0 0.0
    %1395 = vmatpush1.msra.mxu0 %v1370
    %1396 = vmatprep.subr.mxu0 0.0
    %1397 = vmatpush1.msra.mxu0 %v1371
    %1398 = vmatprep.subr.mxu0 0.0
    %1399 = vmatpush1.msra.mxu0 0.0
    %1400 = vmatprep.subr.mxu0 0.0
    %1401 = vmatpush1.msra.mxu0 0.0
    %1402 = vmatprep.subr.mxu0 0.0
    %1403 = vmatpush1.msra.mxu0 0.0
    %1404 = vmatprep.subr.mxu0 0.0
    %1405 = vmatpush1.msra.mxu0 0.0
    %1406 = vmatprep.subr.mxu0 0.0
    %1407 = vmatpush1.msra.mxu0 0.0
    %1408 = vmatprep.subr.mxu0 0.0
    %1409 = vmatpush1.msra.mxu0 0.0
    %1410 = vmatprep.subr.mxu0 0.0
    %1411 = vmatpush1.msra.mxu0 0.0
    %1412 = vmatprep.subr.mxu0 0.0
    %1413 = vmatpush1.msra.mxu0 0.0
    %1414 = vmatprep.subr.mxu0 0.0
    %1415 = vmatpush1.msra.mxu0 0.0
    %1416 = vmatprep.subr.mxu0 0.0
    %1417 = vmatpush1.msra.mxu0 0.0
    %1418 = vmatprep.subr.mxu0 0.0
    %1419 = vmatpush1.msra.mxu0 0.0
    %1420 = vmatprep.subr.mxu0 0.0
    %1421 = vmatpush1.msra.mxu0 0.0
    %1422 = vmatprep.subr.mxu0 0.0
    %1423 = vmatpush1.msra.mxu0 0.0
    %1424 = vmatprep.subr.mxu0 0.0
    %1425 = vmatpush1.msra.mxu0 0.0
    %1426 = vmatprep.subr.mxu0 0.0
    %1427 = vmatpush1.msra.mxu0 0.0
    %1428 = vmatprep.subr.mxu0 0.0
    %1429 = vmatpush1.msra.mxu0 0.0
    %1430 = vmatprep.subr.mxu0 0.0
    %1431 = vmatpush1.msra.mxu0 0.0
    %1432 = vmatprep.subr.mxu0 0.0
    %1433 = vmatpush1.msra.mxu0 0.0
    %1434 = vmatprep.subr.mxu0 0.0
    %1435 = vmatpush1.msra.mxu0 0.0
    %1436 = vmatprep.subr.mxu0 0.0
    %1437 = vmatpush1.msra.mxu0 0.0
    %1438 = vmatprep.subr.mxu0 0.0
    %1439 = vmatpush1.msra.mxu0 0.0
    %1440 = vmatprep.subr.mxu0 0.0
    %1441 = vmatpush1.msra.mxu0 0.0
    %1442 = vmatprep.subr.mxu0 0.0
    %1443 = vmatpush1.msra.mxu0 0.0
    %1444 = vmatprep.subr.mxu0 0.0
    %1445 = vmatpush1.msra.mxu0 0.0
    %1446 = vmatprep.mubr.f32.mxu0 0.0
    %1447 = vmatmul.mubr.f32.gmra.mrb[0].mxu0 %v1380
    %v1448 = vpop.f32.mrb[0].mxu0
    %v1449 = vadd.f32 %v1377, %v1448
    %v1450 = vpop.f32.mrb[0].mxu0
    %1451 = vdwg.mxu0
    %v1452 = vmax.f32 %v1449, 0.0
    %v1453 = vld [vmem:[#allocation8] sm:$0xff]
    %v1454 = vld [vmem:[#allocation8 + $0x8] sm:$0xff]
    %v1455 = vld [vmem:[#allocation8 + $0x10] sm:$0xff]
    %v1456 = vld [vmem:[#allocation8 + $0x18] sm:$0xff]
    %v1457 = vld [vmem:[#allocation8 + $0x20] sm:$0xff]
    %v1458 = vld [vmem:[#allocation8 + $0x28] sm:$0xff]
    %v1459 = vld [vmem:[#allocation8 + $0x30] sm:$0xff]
    %v1460 = vld [vmem:[#allocation8 + $0x38] sm:$0xff]
    %v1461 = vld [vmem:[%s16] sm:$0x1]
    %v1463 = vlaneseq
    %v1464 = vshrl.u32 %v1463, 7
    %v1465 = vsub.s32 0, %v1464
    %v1466 = vrot.slane %v1461, %v1465
    %v1469 = vsel %vm1282, %v1452, 0
    %1471 = vmatprep.subr.mxu0 0.0
    %1472 = vmatpush1.msra.mxu0 %v1453
    %1473 = vmatprep.subr.mxu0 0.0
    %1474 = vmatpush1.msra.mxu0 %v1454
    %1475 = vmatprep.subr.mxu0 0.0
    %1476 = vmatpush1.msra.mxu0 %v1455
    %1477 = vmatprep.subr.mxu0 0.0
    %1478 = vmatpush1.msra.mxu0 %v1456
    %1479 = vmatprep.subr.mxu0 0.0
    %1480 = vmatpush1.msra.mxu0 %v1457
    %1481 = vmatprep.subr.mxu0 0.0
    %1482 = vmatpush1.msra.mxu0 %v1458
    %1483 = vmatprep.subr.mxu0 0.0
    %1484 = vmatpush1.msra.mxu0 %v1459
    %1485 = vmatprep.subr.mxu0 0.0
    %1486 = vmatpush1.msra.mxu0 %v1460
    %1487 = vmatprep.subr.mxu0 0.0
    %1488 = vmatpush1.msra.mxu0 0.0
    %1489 = vmatprep.subr.mxu0 0.0
    %1490 = vmatpush1.msra.mxu0 0.0
    %1491 = vmatprep.subr.mxu0 0.0
    %1492 = vmatpush1.msra.mxu0 0.0
    %1493 = vmatprep.subr.mxu0 0.0
    %1494 = vmatpush1.msra.mxu0 0.0
    %1495 = vmatprep.subr.mxu0 0.0
    %1496 = vmatpush1.msra.mxu0 0.0
    %1497 = vmatprep.subr.mxu0 0.0
    %1498 = vmatpush1.msra.mxu0 0.0
    %1499 = vmatprep.subr.mxu0 0.0
    %1500 = vmatpush1.msra.mxu0 0.0
    %1501 = vmatprep.subr.mxu0 0.0
    %1502 = vmatpush1.msra.mxu0 0.0
    %1503 = vmatprep.subr.mxu0 0.0
    %1504 = vmatpush1.msra.mxu0 0.0
    %1505 = vmatprep.subr.mxu0 0.0
    %1506 = vmatpush1.msra.mxu0 0.0
    %1507 = vmatprep.subr.mxu0 0.0
    %1508 = vmatpush1.msra.mxu0 0.0
    %1509 = vmatprep.subr.mxu0 0.0
    %1510 = vmatpush1.msra.mxu0 0.0
    %1511 = vmatprep.subr.mxu0 0.0
    %1512 = vmatpush1.msra.mxu0 0.0
    %1513 = vmatprep.subr.mxu0 0.0
    %1514 = vmatpush1.msra.mxu0 0.0
    %1515 = vmatprep.subr.mxu0 0.0
    %1516 = vmatpush1.msra.mxu0 0.0
    %1517 = vmatprep.subr.mxu0 0.0
    %1518 = vmatpush1.msra.mxu0 0.0
    %1519 = vmatprep.subr.mxu0 0.0
    %1520 = vmatpush1.msra.mxu0 0.0
    %1521 = vmatprep.subr.mxu0 0.0
    %1522 = vmatpush1.msra.mxu0 0.0
    %1523 = vmatprep.subr.mxu0 0.0
    %1524 = vmatpush1.msra.mxu0 0.0
    %1525 = vmatprep.subr.mxu0 0.0
    %1526 = vmatpush1.msra.mxu0 0.0
    %1527 = vmatprep.subr.mxu0 0.0
    %1528 = vmatpush1.msra.mxu0 0.0
    %1529 = vmatprep.subr.mxu0 0.0
    %1530 = vmatpush1.msra.mxu0 0.0
    %1531 = vmatprep.subr.mxu0 0.0
    %1532 = vmatpush1.msra.mxu0 0.0
    %1533 = vmatprep.subr.mxu0 0.0
    %1534 = vmatpush1.msra.mxu0 0.0
    %1535 = vmatprep.mubr.f32.mxu0 0.0
    %1536 = vmatmul.mubr.f32.gmra.mrb[0].mxu0 %v1469
    %v1537 = vpop.f32.mrb[0].mxu0
    %v1538 = vadd.f32 %v1466, %v1537
    %v1539 = vpop.f32.mrb[0].mxu0
    %1540 = vdwg.mxu0
    %v1541 = vxor.u32 %v1538, 2147483648
    %v1542 = vmul.f32 %v1541, 1.442695
    %v1543 = vpow.pop %v1542
    %v1544 = vadd.f32 %v1543, 1.0
    %v1545 = vrcp.pop %v1544
    %v1546 = vmul.f32 1.0, %v1545
    %v1547 = vadd.f32 %v1175, 1.0
    %v1548 = vmul.f32 %v1175, %v1175
    %1550 = vrot.lane.b32.xlu0 %v1548, 64
    %v1551 = vpop.permute.xlu0 %1550
    %v1553 = vsub.f32 %v1547, %v1551
    %v1554 = vmul.f32 %v1175, 1.442695
    %v1555 = vpow.pop %v1554
    %v1556 = vsub.f32 %v1553, %v1555
    %v1557 = vmul.f32 %v1556, -0.5
    %1559 = vrot.lane.b32.xlu0 %v1557, 64
    %v1560 = vpop.permute.xlu0 %1559
    %vm1562 = vcmask 517120
    %v1563 = vsel %vm1562, %v1560, 0.0
    %1564 = vadd.xlane.f32.xlu0 %v1563
    %v1565 = vpop.xlane.xlu0 %1564
    %v1566 = vrot.slane %v1565, 4
    %v1567 = vadd.f32 %v1565, %v1566
    %v1568 = vrot.slane %v1567, 2
    %v1569 = vadd.f32 %v1567, %v1568
    %v1570 = vrot.slane %v1569, 1
    %v1571 = vadd.f32 %v1569, %v1570
    %s1572 = vtos %v1571
    %s1573 = smul.f32 %s1572, 0.0078125
    %v1574 = vstv %s1573
    %vm1575 = vcmask 0
    %1576 = vst.msk [vmem:[#allocation11] sm:$0x1] %vm1575, %v1574
    %v1577 = vsub.f32 %v901, %v1546
    %v1578 = vmul.f32 %v1577, %v1577
    %vm1579 = vcmask 1041408
    %v1580 = vsel %vm1579, %v1578, 0.0
    %1581 = vadd.xlane.f32.xlu0 %v1580
    %v1582 = vpop.xlane.xlu0 %1581
    %v1583 = vrot.slane %v1582, 4
    %v1584 = vadd.f32 %v1582, %v1583
    %v1585 = vrot.slane %v1584, 2
    %v1586 = vadd.f32 %v1584, %v1585
    %v1587 = vrot.slane %v1586, 1
    %v1588 = vadd.f32 %v1586, %v1587
    %s1589 = vtos %v1588
    %s1590 = smul.f32 %s1589, 0.00390625
    %v1591 = vstv %s1590
    %1592 = vst.msk [vmem:[#allocation13] sm:$0x1] %vm1575, %v1591
    %1593 = vst [vmem:[%s17] sm:$0x3] %v1175
    %1594 = vst.msk [vmem:[#allocation10] sm:$0x3] %vm1562, %v1363
    // Predicated region
    $region86: #{task_cvae2_forward.1} parent=1 // pred_check
      _
    $region87: #{task_cvae2_forward.1} parent=1 // pred_check_branch
      %1596 = sbr.rel (0) target = $region89
    $region88: #{task_cvae2_forward.1} parent=1 // pred_region
      _
    $region89: #{task_cvae2_forward.1} parent=1 // pred_fallthru
      _
    // Predicated region
    $region90: #{task_cvae2_forward.1} parent=1 // pred_check
      _
    $region91: #{task_cvae2_forward.1} parent=1 // pred_check_branch
      %1598 = sbr.rel (0) target = $region93
    $region92: #{task_cvae2_forward.1} parent=1 // pred_region
      %s1600 = ssub.s32 32, 32
      %1601 = vsyncadd [#allocation4], %s1600
      %s1603 = sshll.u32 [#allocation10], 4
      %s1604 = int_to_ptr.vmem [resolvable:$true] %s1603
      %1606 = dma.vmem_to_hbm [thread:$0]  %s1604, 32, %s18, [#allocation4]
    $region93: #{task_cvae2_forward.1} parent=1 // pred_fallthru
      _
    // Predicated region
    $region94: #{task_cvae2_forward.1} parent=1 // pred_check
      _
    $region95: #{task_cvae2_forward.1} parent=1 // pred_check_branch
      %1608 = sbr.rel (0) target = $region97
    $region96: #{task_cvae2_forward.1} parent=1 // pred_region
      %s1610 = ssub.s32 16, 16
      %1611 = vsyncadd [#allocation12], %s1610
      %s1613 = sshll.u32 [#allocation11], 4
      %s1614 = int_to_ptr.vmem [resolvable:$true] %s1613
      %1616 = dma.vmem_to_hbm [thread:$0]  %s1614, 16, %s19, [#allocation12]
    $region97: #{task_cvae2_forward.1} parent=1 // pred_fallthru
      _
    // Predicated region
    $region98: #{task_cvae2_forward.1} parent=1 // pred_check
      _
    $region99: #{task_cvae2_forward.1} parent=1 // pred_check_branch
      %1618 = sbr.rel (0) target = $region101
    $region100: #{task_cvae2_forward.1} parent=1 // pred_region
      %s1620 = ssub.s32 16, 16
      %1621 = vsyncadd [#allocation12], %s1620
      %s1623 = sshll.u32 [#allocation13], 4
      %s1624 = int_to_ptr.vmem [resolvable:$true] %s1623
      %1626 = dma.vmem_to_hbm [thread:$0]  %s1624, 16, %s20, [#allocation12]
    $region101: #{task_cvae2_forward.1} parent=1 // pred_fallthru
      _
    // Predicated region
    $region102: #{task_cvae2_forward.1} parent=1 // pred_check
      _
    $region103: #{task_cvae2_forward.1} parent=1 // pred_check_branch
      %1628 = sbr.rel (0) target = $region105
    $region104: #{task_cvae2_forward.1} parent=1 // pred_region
      _
    $region105: #{task_cvae2_forward.1} parent=1 // pred_fallthru
      _
    // Predicated region
    $region106: #{task_cvae2_forward.1} parent=1 // pred_check
      _
    $region107: #{task_cvae2_forward.1} parent=1 // pred_check_branch
      %1630 = sbr.rel (0) target = $region109
    $region108: #{task_cvae2_forward.1} parent=1 // pred_region
      %1631 = dma.done [#allocation4], 32
    $region109: #{task_cvae2_forward.1} parent=1 // pred_fallthru
      _
    // Predicated region
    $region110: #{task_cvae2_forward.1} parent=1 // pred_check
      _
    $region111: #{task_cvae2_forward.1} parent=1 // pred_check_branch
      %1633 = sbr.rel (0) target = $region113
    $region112: #{task_cvae2_forward.1} parent=1 // pred_region
      %1634 = dma.done [#allocation12], 16
    $region113: #{task_cvae2_forward.1} parent=1 // pred_fallthru
      _
    // Predicated region
    $region114: #{task_cvae2_forward.1} parent=1 // pred_check
      _
    $region115: #{task_cvae2_forward.1} parent=1 // pred_check_branch
      %1636 = sbr.rel (0) target = $region117
    $region116: #{task_cvae2_forward.1} parent=1 // pred_region
      %1637 = dma.done [#allocation12], 16
    $region117: #{task_cvae2_forward.1} parent=1 // pred_fallthru
      _
    %1638 = vsyncpa [#allocation3], 1
    %1639 = vsyncpa [#allocation6], 1
    %1640 = vsyncpa [#allocation9], 1
    %1641 = vsyncpa [#allocation4], 1
    %1642 = vsyncpa [#allocation12], 1

</llo_original>
